<compile_context>
chip_gen: v5e
topology: v5e:2x2
jax: 0.10.0
libtpu: 0.0.40
codegen_flags: <defaults>
</compile_context>

<pallas_src>
import functools

import jax
import jax.numpy as jnp
from jax.experimental import pallas as pl
from jax.experimental.pallas import tpu as pltpu

_MATMUL_DTYPE = jnp.bfloat16  # MXU-native on v5e / v6e / v7x; softmax stays f32


def _gat_fused_kernel(*refs, layers, negative_slope):
    """All GATConv layers fused; one grid step == one graph of the batch.

    refs = (x_ref, adj_ref, w_aug_ref_0, ..., w_aug_ref_{L-1}, out_ref)
    layers: tuple of (num_heads, f_out, apply_elu, is_last) per layer (static).
    Each w_aug_ref holds (F_in, H*F_out + 2H): [feats | el cols | er cols].
    """
    num_layers = len(layers)
    x_ref, adj_ref = refs[0], refs[1]
    w_refs = refs[2:2 + num_layers]
    o_ref = refs[2 + num_layers]

    n = adj_ref.shape[1]

    # Additive softmax mask built in-kernel: 0 on edge, -1e30 elsewhere.
    # (adj arrives as int8 -> 1 byte/entry of N^2 DMA instead of 4.)
    bias = jnp.where(adj_ref[0].astype(jnp.float32) > 0.0, 0.0, -1e30)   # (N, N)

    bias_tiled = {}  # lane-tiled bias per head count, built once and reused

    def tiled_bias(h):
        if h not in bias_tiled:
            bias_tiled[h] = bias if h == 1 else jnp.concatenate([bias] * h, axis=-1)
        return bias_tiled[h]

    h_feat = x_ref[0].astype(jnp.float32)                                # (N, F_in)

    for (num_heads, f_out, apply_elu, is_last), w_ref in zip(layers, w_refs):
        # One wide MXU matmul yields [feat_h0..feat_hH | el (N,H) | er (N,H)].
        proj = jnp.dot(h_feat.astype(_MATMUL_DTYPE),
                       w_ref[...].astype(_MATMUL_DTYPE),
                       preferred_element_type=jnp.float32)
        hf = num_heads * f_out
        feat_all = proj[:, :hf]                                          # (N, H*F_out)
        el_all = proj[:, hf:hf + num_heads]                              # (N, H) src terms
        er_all = proj[:, hf + num_heads:hf + 2 * num_heads]              # (N, H) dst terms
        el_t = jnp.transpose(el_all)                                     # (H, N), one XLU transpose

        # score_h[i, j] = el[j, h] + er[i, h]; pack heads along the lane axis.
        blocks = [er_all[:, hd:hd + 1] + el_t[hd:hd + 1, :] for hd in range(num_heads)]
        s = blocks[0] if num_heads == 1 else jnp.concatenate(blocks, axis=-1)  # (N, H*N)

        # LeakyReLU: max form is valid because negative_slope < 1.
        if negative_slope <= 1.0:
            s = jnp.maximum(s, negative_slope * s)
        else:
            s = jnp.where(s >= 0.0, s, negative_slope * s)
        s = s + tiled_bias(num_heads)

        # Cross-head row max: softmax is shift-invariant per row, so a single
        # shared max per destination keeps exp <= 1 without per-head reductions.
        m = jnp.max(s, axis=-1, keepdims=True)                           # (N, 1)
        p = jnp.exp(s - m)      # masked (-1e30) entries underflow to exactly 0

        outs = []
        for hd in range(num_heads):
            p_h = p[:, hd * n:(hd + 1) * n]                              # (N, N)
            feat_h = feat_all[:, hd * f_out:(hd + 1) * f_out]            # (N, F_out)
            denom = jnp.sum(p_h, axis=-1, keepdims=True)                 # (N, 1)
            # Normalize after the matmul: (P @ F) / denom == (P/denom) @ F, but
            # only F_out columns to scale instead of N.
            agg = jnp.dot(p_h.astype(_MATMUL_DTYPE), feat_h.astype(_MATMUL_DTYPE),
                          preferred_element_type=jnp.float32)
            outs.append(agg * pl.reciprocal(jnp.maximum(denom, 1e-20), approx=True))

        if is_last:
            # output layer: mean over heads  (.mean(1))
            out = outs[0]
            for o in outs[1:]:
                out = out + o
            out = out * (1.0 / num_heads)
        else:
            # hidden layer: concat heads (.flatten(1)) then ELU
            out = outs[0] if num_heads == 1 else jnp.concatenate(outs, axis=-1)
            if apply_elu:
                # TODO(synk): expm1 would be marginally more accurate near 0, but
                # exp(min(x,0))-1 matches the reference within f32 noise.
                out = jnp.where(out > 0.0, out,
                                jnp.exp(jnp.minimum(out, 0.0)) - 1.0)
        h_feat = out

    o_ref[0] = h_feat.astype(o_ref.dtype)


def _augment_weights(W, attn_l, attn_r):
    """Fold attention vectors into the projection with a grouped column layout.

    W: (H, F_in, F_out), attn_l/attn_r: (H, 1, F_out)
    returns (F_in, H*F_out + 2H) = [feat_h0..feat_hH | el cols | er cols], so
    (h @ W_aug) yields per-head features in .flatten(1) order plus el/er slabs.
    """
    H, F_in, F_out = W.shape
    feat = jnp.transpose(W, (1, 0, 2)).reshape(F_in, H * F_out)
    wl = jnp.einsum('hif,hf->ih', W, attn_l[:, 0, :])   # (F_in, H)
    wr = jnp.einsum('hif,hf->ih', W, attn_r[:, 0, :])   # (F_in, H)
    return jnp.concatenate([feat, wl, wr], axis=-1)


@functools.partial(jax.jit, static_argnames=("layers", "negative_slope"))
def gat_forward(x, adj, w_augs, *, layers, negative_slope=0.2):
    """GAT.forward for a batch of graphs: hidden layers (concat heads, ELU) ->
    output layer (head mean). x:(B,N,F_in) f32, adj:(B,N,N) int8 (with self-loops)."""
    B, N, _ = x.shape
    num_classes = layers[-1][1]

    kernel = functools.partial(_gat_fused_kernel, layers=layers,
                               negative_slope=negative_slope)

    in_specs = [
        pl.BlockSpec((1,) + x.shape[1:], lambda b: (b, 0, 0)),
        pl.BlockSpec((1,) + adj.shape[1:], lambda b: (b, 0, 0)),
    ]
    for w in w_augs:
        in_specs.append(pl.BlockSpec(w.shape, lambda b: (0, 0)))

    # TODO(synk): output is only num_classes(=4) lanes wide -> masked vst; pad to a
    # lane multiple and slice outside if this ever becomes store-bound.
    logits = pl.pallas_call(
        kernel,
        out_shape=jax.ShapeDtypeStruct((B, N, num_classes), jnp.float32),
        grid=(B,),
        in_specs=in_specs,
        out_specs=pl.BlockSpec((1, N, num_classes), lambda b: (b, 0, 0)),
        compiler_params=pltpu.CompilerParams(
            dimension_semantics=("parallel",),          # batch axis -> 2nd TC on v7x
            vmem_limit_bytes=32 * 1024 * 1024),
    )(x, adj, *w_augs)
    return logits


def _init_layer(key, f_in, f_out, n_heads):
    k1, k2, k3 = jax.random.split(key, 3)
    gain = jnp.sqrt(2.0)
    w_std = gain * jnp.sqrt(2.0 / (f_in + f_out))           # xavier_normal-ish
    a_std = gain * jnp.sqrt(2.0 / (1 + f_out))
    W = w_std * jax.random.normal(k1, (n_heads, f_in, f_out), jnp.float32)
    al = a_std * jax.random.normal(k2, (n_heads, 1, f_out), jnp.float32)
    ar = a_std * jax.random.normal(k3, (n_heads, 1, f_out), jnp.float32)
    return W, al, ar


if __name__ == "__main__":
    key = jax.random.PRNGKey(0)

    # small synthetic config (matches GAT.__init__ shape logic)
    B = 2                        # batch of independent graphs (parallel grid axis)
    N = 64                       # nodes per graph
    in_dim = 16
    num_hidden = 8
    num_classes = 4
    num_layers = 2
    heads = [2, 2, 1]            # heads[0..num_layers-1] hidden, heads[-1] output
    negative_slope = 0.2

    k_adj, k_x, k0, k1, k2 = jax.random.split(key, 5)

    # dense adjacency with self-loops, stored as int8 (mask is built in-kernel)
    adj = jax.random.uniform(k_adj, (B, N, N)) < 0.25
    adj = jnp.logical_or(adj, jnp.eye(N, dtype=bool)[None]).astype(jnp.int8)

    x = jax.random.normal(k_x, (B, N, in_dim), jnp.float32)

    raw_params = [
        _init_layer(k0, in_dim, num_hidden, heads[0]),
        _init_layer(k1, num_hidden * heads[0], num_hidden, heads[1]),
        _init_layer(k2, num_hidden * heads[-2], num_classes, heads[-1]),
    ]
    # augmentation math in f32, stored bf16 (MXU-native operands, half the weight DMA)
    w_augs = tuple(_augment_weights(*p).astype(_MATMUL_DTYPE) for p in raw_params)

    # static per-layer metadata: (num_heads, f_out, apply_elu, is_last)
    layers = (
        (heads[0], num_hidden, True, False),
        (heads[1], num_hidden, True, False),
        (heads[2], num_classes, False, True),
    )

    logits = gat_forward(x, adj, w_augs, layers=layers,
                         negative_slope=negative_slope)
    jax.block_until_ready(logits)
    assert logits.shape == (B, N, num_classes), logits.shape
    print("KERNEL_OK")
</pallas_src>

<mosaic_0001>
module attributes {stable_mosaic.version = 11 : i64} {
  func.func @_gat_fused_kernel(%arg0: i32, %arg1: memref<1x64x16xf32, #tpu.memory_space<vmem>>, %arg2: memref<1x64x64xi8, #tpu.memory_space<vmem>>, %arg3: memref<16x20xbf16, #tpu.memory_space<vmem>>, %arg4: memref<16x20xbf16, #tpu.memory_space<vmem>>, %arg5: memref<16x6xbf16, #tpu.memory_space<vmem>>, %arg6: memref<1x64x4xf32, #tpu.memory_space<vmem>>) attributes {dimension_semantics = [#tpu.dimension_semantics<parallel>], iteration_bounds = array<i64: 2>, scalar_prefetch = 0 : i64, scratch_operands = 0 : i64, tpu.core_type = #tpu.core_type<tc>, window_params = [{transform_indices = @transform_0, window_bounds = array<i64: 1, 64, 16>}, {transform_indices = @transform_1, window_bounds = array<i64: 1, 64, 64>}, {pipeline_mode = #tpu.pipeline_mode<synchronous>, transform_indices = @transform_2, window_bounds = array<i64: 16, 20>}, {pipeline_mode = #tpu.pipeline_mode<synchronous>, transform_indices = @transform_3, window_bounds = array<i64: 16, 20>}, {pipeline_mode = #tpu.pipeline_mode<synchronous>, transform_indices = @transform_4, window_bounds = array<i64: 16, 6>}, {transform_indices = @transform_5, window_bounds = array<i64: 1, 64, 4>}]} {
    %c0 = arith.constant 0 : index
    %c0_0 = arith.constant 0 : index
    %c0_1 = arith.constant 0 : index
    %0 = vector.load %arg2[%c0, %c0_0, %c0_1] : memref<1x64x64xi8, #tpu.memory_space<vmem>>, vector<1x64x64xi8>
    %1 = vector.shape_cast %0 : vector<1x64x64xi8> to vector<64x64xi8>
    %2 = arith.sitofp %1 : vector<64x64xi8> to vector<64x64xf32>
    %cst = arith.constant 0.000000e+00 : f32
    %3 = vector.broadcast %cst : f32 to vector<64x64xf32>
    %4 = arith.cmpf ogt, %2, %3 : vector<64x64xf32>
    %cst_2 = arith.constant 0.000000e+00 : f32
    %cst_3 = arith.constant -1.000000e+30 : f32
    %5 = vector.broadcast %cst_2 : f32 to vector<64x64xf32>
    %6 = vector.broadcast %cst_3 : f32 to vector<64x64xf32>
    %7 = arith.select %4, %5, %6 : vector<64x64xi1>, vector<64x64xf32>
    %c0_4 = arith.constant 0 : index
    %c0_5 = arith.constant 0 : index
    %c0_6 = arith.constant 0 : index
    %8 = vector.load %arg1[%c0_4, %c0_5, %c0_6] : memref<1x64x16xf32, #tpu.memory_space<vmem>>, vector<1x64x16xf32>
    %9 = vector.shape_cast %8 : vector<1x64x16xf32> to vector<64x16xf32>
    %10 = arith.truncf %9 : vector<64x16xf32> to vector<64x16xbf16>
    %c0_7 = arith.constant 0 : index
    %c0_8 = arith.constant 0 : index
    %11 = vector.load %arg3[%c0_7, %c0_8] : memref<16x20xbf16, #tpu.memory_space<vmem>>, vector<16x20xbf16>
    %cst_9 = arith.constant dense<0.000000e+00> : vector<64x20xf32>
    %12 = tpu.matmul %10, %11, %cst_9 {dimension_numbers = #tpu.dot_dimension_numbers<[1], [0], [0], [1], [0, 0, 1, 1], [], []>} : vector<64x16xbf16>, vector<16x20xbf16>, vector<64x20xf32> -> vector<64x20xf32>
    %13 = vector.extract_strided_slice %12 {offsets = [0, 0], sizes = [64, 16], strides = [1, 1]} : vector<64x20xf32> to vector<64x16xf32>
    %14 = vector.extract_strided_slice %12 {offsets = [0, 16], sizes = [64, 2], strides = [1, 1]} : vector<64x20xf32> to vector<64x2xf32>
    %15 = vector.extract_strided_slice %12 {offsets = [0, 18], sizes = [64, 2], strides = [1, 1]} : vector<64x20xf32> to vector<64x2xf32>
    %16 = tpu.transpose %14, [1, 0] : vector<64x2xf32> -> vector<2x64xf32>
    %17 = vector.extract_strided_slice %15 {offsets = [0, 0], sizes = [64, 1], strides = [1, 1]} : vector<64x2xf32> to vector<64x1xf32>
    %18 = vector.extract_strided_slice %16 {offsets = [0, 0], sizes = [1, 64], strides = [1, 1]} : vector<2x64xf32> to vector<1x64xf32>
    %19 = vector.broadcast %17 : vector<64x1xf32> to vector<64x64xf32>
    %20 = vector.broadcast %18 : vector<1x64xf32> to vector<64x64xf32>
    %21 = arith.addf %19, %20 : vector<64x64xf32>
    %22 = vector.extract_strided_slice %15 {offsets = [0, 1], sizes = [64, 1], strides = [1, 1]} : vector<64x2xf32> to vector<64x1xf32>
    %23 = vector.extract_strided_slice %16 {offsets = [1, 0], sizes = [1, 64], strides = [1, 1]} : vector<2x64xf32> to vector<1x64xf32>
    %24 = vector.broadcast %22 : vector<64x1xf32> to vector<64x64xf32>
    %25 = vector.broadcast %23 : vector<1x64xf32> to vector<64x64xf32>
    %26 = arith.addf %24, %25 : vector<64x64xf32>
    %27 = tpu.concatenate %21, %26 in 1 : vector<64x64xf32>, vector<64x64xf32> -> vector<64x128xf32>
    %cst_10 = arith.constant 2.000000e-01 : f32
    %28 = vector.broadcast %cst_10 : f32 to vector<64x128xf32>
    %29 = arith.mulf %28, %27 : vector<64x128xf32>
    %30 = arith.maximumf %27, %29 : vector<64x128xf32>
    %31 = tpu.concatenate %7, %7 in 1 : vector<64x64xf32>, vector<64x64xf32> -> vector<64x128xf32>
    %32 = arith.addf %30, %31 : vector<64x128xf32>
    %cst_11 = arith.constant dense<0xFF800000> : vector<64xf32>
    %33 = vector.multi_reduction <maximumf>, %32, %cst_11 [1] : vector<64x128xf32> to vector<64xf32>
    %34 = vector.shape_cast %33 : vector<64xf32> to vector<64x1xf32>
    %35 = vector.broadcast %34 : vector<64x1xf32> to vector<64x128xf32>
    %36 = arith.subf %32, %35 : vector<64x128xf32>
    %37 = math.exp %36 : vector<64x128xf32>
    %38 = vector.extract_strided_slice %37 {offsets = [0, 0], sizes = [64, 64], strides = [1, 1]} : vector<64x128xf32> to vector<64x64xf32>
    %39 = vector.extract_strided_slice %13 {offsets = [0, 0], sizes = [64, 8], strides = [1, 1]} : vector<64x16xf32> to vector<64x8xf32>
    %cst_12 = arith.constant dense<0.000000e+00> : vector<64xf32>
    %40 = vector.multi_reduction <add>, %38, %cst_12 [1] : vector<64x64xf32> to vector<64xf32>
    %41 = vector.shape_cast %40 : vector<64xf32> to vector<64x1xf32>
    %42 = arith.truncf %38 : vector<64x64xf32> to vector<64x64xbf16>
    %43 = arith.truncf %39 : vector<64x8xf32> to vector<64x8xbf16>
    %cst_13 = arith.constant dense<0.000000e+00> : vector<64x8xf32>
    %44 = tpu.matmul %42, %43, %cst_13 {dimension_numbers = #tpu.dot_dimension_numbers<[1], [0], [0], [1], [0, 0, 1, 1], [], []>} : vector<64x64xbf16>, vector<64x8xbf16>, vector<64x8xf32> -> vector<64x8xf32>
    %cst_14 = arith.constant 9.99999968E-21 : f32
    %45 = vector.broadcast %cst_14 : f32 to vector<64x1xf32>
    %46 = arith.maximumf %41, %45 : vector<64x1xf32>
    %47 = tpu.reciprocal %46 {approx = true} : vector<64x1xf32> -> vector<64x1xf32>
    %48 = vector.broadcast %47 : vector<64x1xf32> to vector<64x8xf32>
    %49 = arith.mulf %44, %48 : vector<64x8xf32>
    %50 = vector.extract_strided_slice %37 {offsets = [0, 64], sizes = [64, 64], strides = [1, 1]} : vector<64x128xf32> to vector<64x64xf32>
    %51 = vector.extract_strided_slice %13 {offsets = [0, 8], sizes = [64, 8], strides = [1, 1]} : vector<64x16xf32> to vector<64x8xf32>
    %cst_15 = arith.constant dense<0.000000e+00> : vector<64xf32>
    %52 = vector.multi_reduction <add>, %50, %cst_15 [1] : vector<64x64xf32> to vector<64xf32>
    %53 = vector.shape_cast %52 : vector<64xf32> to vector<64x1xf32>
    %54 = arith.truncf %50 : vector<64x64xf32> to vector<64x64xbf16>
    %55 = arith.truncf %51 : vector<64x8xf32> to vector<64x8xbf16>
    %cst_16 = arith.constant dense<0.000000e+00> : vector<64x8xf32>
    %56 = tpu.matmul %54, %55, %cst_16 {dimension_numbers = #tpu.dot_dimension_numbers<[1], [0], [0], [1], [0, 0, 1, 1], [], []>} : vector<64x64xbf16>, vector<64x8xbf16>, vector<64x8xf32> -> vector<64x8xf32>
    %cst_17 = arith.constant 9.99999968E-21 : f32
    %57 = vector.broadcast %cst_17 : f32 to vector<64x1xf32>
    %58 = arith.maximumf %53, %57 : vector<64x1xf32>
    %59 = tpu.reciprocal %58 {approx = true} : vector<64x1xf32> -> vector<64x1xf32>
    %60 = vector.broadcast %59 : vector<64x1xf32> to vector<64x8xf32>
    %61 = arith.mulf %56, %60 : vector<64x8xf32>
    %62 = tpu.concatenate %49, %61 in 1 : vector<64x8xf32>, vector<64x8xf32> -> vector<64x16xf32>
    %cst_18 = arith.constant 0.000000e+00 : f32
    %63 = vector.broadcast %cst_18 : f32 to vector<64x16xf32>
    %64 = arith.cmpf ogt, %62, %63 : vector<64x16xf32>
    %cst_19 = arith.constant 0.000000e+00 : f32
    %65 = vector.broadcast %cst_19 : f32 to vector<64x16xf32>
    %66 = arith.minimumf %62, %65 : vector<64x16xf32>
    %67 = math.exp %66 : vector<64x16xf32>
    %cst_20 = arith.constant 1.000000e+00 : f32
    %68 = vector.broadcast %cst_20 : f32 to vector<64x16xf32>
    %69 = arith.subf %67, %68 : vector<64x16xf32>
    %70 = arith.select %64, %62, %69 : vector<64x16xi1>, vector<64x16xf32>
    %71 = arith.truncf %70 : vector<64x16xf32> to vector<64x16xbf16>
    %c0_21 = arith.constant 0 : index
    %c0_22 = arith.constant 0 : index
    %72 = vector.load %arg4[%c0_21, %c0_22] : memref<16x20xbf16, #tpu.memory_space<vmem>>, vector<16x20xbf16>
    %cst_23 = arith.constant dense<0.000000e+00> : vector<64x20xf32>
    %73 = tpu.matmul %71, %72, %cst_23 {dimension_numbers = #tpu.dot_dimension_numbers<[1], [0], [0], [1], [0, 0, 1, 1], [], []>} : vector<64x16xbf16>, vector<16x20xbf16>, vector<64x20xf32> -> vector<64x20xf32>
    %74 = vector.extract_strided_slice %73 {offsets = [0, 0], sizes = [64, 16], strides = [1, 1]} : vector<64x20xf32> to vector<64x16xf32>
    %75 = vector.extract_strided_slice %73 {offsets = [0, 16], sizes = [64, 2], strides = [1, 1]} : vector<64x20xf32> to vector<64x2xf32>
    %76 = vector.extract_strided_slice %73 {offsets = [0, 18], sizes = [64, 2], strides = [1, 1]} : vector<64x20xf32> to vector<64x2xf32>
    %77 = tpu.transpose %75, [1, 0] : vector<64x2xf32> -> vector<2x64xf32>
    %78 = vector.extract_strided_slice %76 {offsets = [0, 0], sizes = [64, 1], strides = [1, 1]} : vector<64x2xf32> to vector<64x1xf32>
    %79 = vector.extract_strided_slice %77 {offsets = [0, 0], sizes = [1, 64], strides = [1, 1]} : vector<2x64xf32> to vector<1x64xf32>
    %80 = vector.broadcast %78 : vector<64x1xf32> to vector<64x64xf32>
    %81 = vector.broadcast %79 : vector<1x64xf32> to vector<64x64xf32>
    %82 = arith.addf %80, %81 : vector<64x64xf32>
    %83 = vector.extract_strided_slice %76 {offsets = [0, 1], sizes = [64, 1], strides = [1, 1]} : vector<64x2xf32> to vector<64x1xf32>
    %84 = vector.extract_strided_slice %77 {offsets = [1, 0], sizes = [1, 64], strides = [1, 1]} : vector<2x64xf32> to vector<1x64xf32>
    %85 = vector.broadcast %83 : vector<64x1xf32> to vector<64x64xf32>
    %86 = vector.broadcast %84 : vector<1x64xf32> to vector<64x64xf32>
    %87 = arith.addf %85, %86 : vector<64x64xf32>
    %88 = tpu.concatenate %82, %87 in 1 : vector<64x64xf32>, vector<64x64xf32> -> vector<64x128xf32>
    %cst_24 = arith.constant 2.000000e-01 : f32
    %89 = vector.broadcast %cst_24 : f32 to vector<64x128xf32>
    %90 = arith.mulf %89, %88 : vector<64x128xf32>
    %91 = arith.maximumf %88, %90 : vector<64x128xf32>
    %92 = arith.addf %91, %31 : vector<64x128xf32>
    %cst_25 = arith.constant dense<0xFF800000> : vector<64xf32>
    %93 = vector.multi_reduction <maximumf>, %92, %cst_25 [1] : vector<64x128xf32> to vector<64xf32>
    %94 = vector.shape_cast %93 : vector<64xf32> to vector<64x1xf32>
    %95 = vector.broadcast %94 : vector<64x1xf32> to vector<64x128xf32>
    %96 = arith.subf %92, %95 : vector<64x128xf32>
    %97 = math.exp %96 : vector<64x128xf32>
    %98 = vector.extract_strided_slice %97 {offsets = [0, 0], sizes = [64, 64], strides = [1, 1]} : vector<64x128xf32> to vector<64x64xf32>
    %99 = vector.extract_strided_slice %74 {offsets = [0, 0], sizes = [64, 8], strides = [1, 1]} : vector<64x16xf32> to vector<64x8xf32>
    %cst_26 = arith.constant dense<0.000000e+00> : vector<64xf32>
    %100 = vector.multi_reduction <add>, %98, %cst_26 [1] : vector<64x64xf32> to vector<64xf32>
    %101 = vector.shape_cast %100 : vector<64xf32> to vector<64x1xf32>
    %102 = arith.truncf %98 : vector<64x64xf32> to vector<64x64xbf16>
    %103 = arith.truncf %99 : vector<64x8xf32> to vector<64x8xbf16>
    %cst_27 = arith.constant dense<0.000000e+00> : vector<64x8xf32>
    %104 = tpu.matmul %102, %103, %cst_27 {dimension_numbers = #tpu.dot_dimension_numbers<[1], [0], [0], [1], [0, 0, 1, 1], [], []>} : vector<64x64xbf16>, vector<64x8xbf16>, vector<64x8xf32> -> vector<64x8xf32>
    %cst_28 = arith.constant 9.99999968E-21 : f32
    %105 = vector.broadcast %cst_28 : f32 to vector<64x1xf32>
    %106 = arith.maximumf %101, %105 : vector<64x1xf32>
    %107 = tpu.reciprocal %106 {approx = true} : vector<64x1xf32> -> vector<64x1xf32>
    %108 = vector.broadcast %107 : vector<64x1xf32> to vector<64x8xf32>
    %109 = arith.mulf %104, %108 : vector<64x8xf32>
    %110 = vector.extract_strided_slice %97 {offsets = [0, 64], sizes = [64, 64], strides = [1, 1]} : vector<64x128xf32> to vector<64x64xf32>
    %111 = vector.extract_strided_slice %74 {offsets = [0, 8], sizes = [64, 8], strides = [1, 1]} : vector<64x16xf32> to vector<64x8xf32>
    %cst_29 = arith.constant dense<0.000000e+00> : vector<64xf32>
    %112 = vector.multi_reduction <add>, %110, %cst_29 [1] : vector<64x64xf32> to vector<64xf32>
    %113 = vector.shape_cast %112 : vector<64xf32> to vector<64x1xf32>
    %114 = arith.truncf %110 : vector<64x64xf32> to vector<64x64xbf16>
    %115 = arith.truncf %111 : vector<64x8xf32> to vector<64x8xbf16>
    %cst_30 = arith.constant dense<0.000000e+00> : vector<64x8xf32>
    %116 = tpu.matmul %114, %115, %cst_30 {dimension_numbers = #tpu.dot_dimension_numbers<[1], [0], [0], [1], [0, 0, 1, 1], [], []>} : vector<64x64xbf16>, vector<64x8xbf16>, vector<64x8xf32> -> vector<64x8xf32>
    %cst_31 = arith.constant 9.99999968E-21 : f32
    %117 = vector.broadcast %cst_31 : f32 to vector<64x1xf32>
    %118 = arith.maximumf %113, %117 : vector<64x1xf32>
    %119 = tpu.reciprocal %118 {approx = true} : vector<64x1xf32> -> vector<64x1xf32>
    %120 = vector.broadcast %119 : vector<64x1xf32> to vector<64x8xf32>
    %121 = arith.mulf %116, %120 : vector<64x8xf32>
    %122 = tpu.concatenate %109, %121 in 1 : vector<64x8xf32>, vector<64x8xf32> -> vector<64x16xf32>
    %cst_32 = arith.constant 0.000000e+00 : f32
    %123 = vector.broadcast %cst_32 : f32 to vector<64x16xf32>
    %124 = arith.cmpf ogt, %122, %123 : vector<64x16xf32>
    %cst_33 = arith.constant 0.000000e+00 : f32
    %125 = vector.broadcast %cst_33 : f32 to vector<64x16xf32>
    %126 = arith.minimumf %122, %125 : vector<64x16xf32>
    %127 = math.exp %126 : vector<64x16xf32>
    %cst_34 = arith.constant 1.000000e+00 : f32
    %128 = vector.broadcast %cst_34 : f32 to vector<64x16xf32>
    %129 = arith.subf %127, %128 : vector<64x16xf32>
    %130 = arith.select %124, %122, %129 : vector<64x16xi1>, vector<64x16xf32>
    %131 = arith.truncf %130 : vector<64x16xf32> to vector<64x16xbf16>
    %c0_35 = arith.constant 0 : index
    %c0_36 = arith.constant 0 : index
    %132 = vector.load %arg5[%c0_35, %c0_36] : memref<16x6xbf16, #tpu.memory_space<vmem>>, vector<16x6xbf16>
    %cst_37 = arith.constant dense<0.000000e+00> : vector<64x6xf32>
    %133 = tpu.matmul %131, %132, %cst_37 {dimension_numbers = #tpu.dot_dimension_numbers<[1], [0], [0], [1], [0, 0, 1, 1], [], []>} : vector<64x16xbf16>, vector<16x6xbf16>, vector<64x6xf32> -> vector<64x6xf32>
    %134 = vector.extract_strided_slice %133 {offsets = [0, 0], sizes = [64, 4], strides = [1, 1]} : vector<64x6xf32> to vector<64x4xf32>
    %135 = vector.extract_strided_slice %133 {offsets = [0, 4], sizes = [64, 1], strides = [1, 1]} : vector<64x6xf32> to vector<64x1xf32>
    %136 = vector.extract_strided_slice %133 {offsets = [0, 5], sizes = [64, 1], strides = [1, 1]} : vector<64x6xf32> to vector<64x1xf32>
    %137 = tpu.transpose %135, [1, 0] : vector<64x1xf32> -> vector<1x64xf32>
    %138 = vector.broadcast %136 : vector<64x1xf32> to vector<64x64xf32>
    %139 = vector.broadcast %137 : vector<1x64xf32> to vector<64x64xf32>
    %140 = arith.addf %138, %139 : vector<64x64xf32>
    %cst_38 = arith.constant 2.000000e-01 : f32
    %141 = vector.broadcast %cst_38 : f32 to vector<64x64xf32>
    %142 = arith.mulf %141, %140 : vector<64x64xf32>
    %143 = arith.maximumf %140, %142 : vector<64x64xf32>
    %144 = arith.addf %143, %7 : vector<64x64xf32>
    %cst_39 = arith.constant dense<0xFF800000> : vector<64xf32>
    %145 = vector.multi_reduction <maximumf>, %144, %cst_39 [1] : vector<64x64xf32> to vector<64xf32>
    %146 = vector.shape_cast %145 : vector<64xf32> to vector<64x1xf32>
    %147 = vector.broadcast %146 : vector<64x1xf32> to vector<64x64xf32>
    %148 = arith.subf %144, %147 : vector<64x64xf32>
    %149 = math.exp %148 : vector<64x64xf32>
    %cst_40 = arith.constant dense<0.000000e+00> : vector<64xf32>
    %150 = vector.multi_reduction <add>, %149, %cst_40 [1] : vector<64x64xf32> to vector<64xf32>
    %151 = vector.shape_cast %150 : vector<64xf32> to vector<64x1xf32>
    %152 = arith.truncf %149 : vector<64x64xf32> to vector<64x64xbf16>
    %153 = arith.truncf %134 : vector<64x4xf32> to vector<64x4xbf16>
    %cst_41 = arith.constant dense<0.000000e+00> : vector<64x4xf32>
    %154 = tpu.matmul %152, %153, %cst_41 {dimension_numbers = #tpu.dot_dimension_numbers<[1], [0], [0], [1], [0, 0, 1, 1], [], []>} : vector<64x64xbf16>, vector<64x4xbf16>, vector<64x4xf32> -> vector<64x4xf32>
    %cst_42 = arith.constant 9.99999968E-21 : f32
    %155 = vector.broadcast %cst_42 : f32 to vector<64x1xf32>
    %156 = arith.maximumf %151, %155 : vector<64x1xf32>
    %157 = tpu.reciprocal %156 {approx = true} : vector<64x1xf32> -> vector<64x1xf32>
    %158 = vector.broadcast %157 : vector<64x1xf32> to vector<64x4xf32>
    %159 = arith.mulf %154, %158 : vector<64x4xf32>
    %cst_43 = arith.constant 1.000000e+00 : f32
    %160 = vector.broadcast %cst_43 : f32 to vector<64x4xf32>
    %161 = arith.mulf %159, %160 : vector<64x4xf32>
    %c0_44 = arith.constant 0 : index
    %c0_45 = arith.constant 0 : index
    %c0_46 = arith.constant 0 : index
    %162 = vector.load %arg6[%c0_44, %c0_45, %c0_46] : memref<1x64x4xf32, #tpu.memory_space<vmem>>, vector<1x64x4xf32>
    %163 = vector.shape_cast %162 : vector<1x64x4xf32> to vector<64x4xf32>
    %164 = vector.shape_cast %161 : vector<64x4xf32> to vector<1x64x4xf32>
    tpu.vector_store %arg6[%c0_44, %c0_45, %c0_46], %164 {strides = array<i32>} : memref<1x64x4xf32, #tpu.memory_space<vmem>>, vector<1x64x4xf32>,
    return
  }
  func.func @transform_0(%arg0: i32) -> (i32, i32, i32) {
    %c0_i32 = arith.constant 0 : i32
    %c0_i32_0 = arith.constant 0 : i32
    %c0_i32_1 = arith.constant 0 : i32
    return %arg0, %c0_i32, %c0_i32_0 : i32, i32, i32
  }
  func.func @transform_1(%arg0: i32) -> (i32, i32, i32) {
    %c0_i32 = arith.constant 0 : i32
    %c0_i32_0 = arith.constant 0 : i32
    %c0_i32_1 = arith.constant 0 : i32
    return %arg0, %c0_i32, %c0_i32_0 : i32, i32, i32
  }
  func.func @transform_2(%arg0: i32) -> (i32, i32) {
    %c0_i32 = arith.constant 0 : i32
    %c0_i32_0 = arith.constant 0 : i32
    %c0_i32_1 = arith.constant 0 : i32
    return %c0_i32, %c0_i32_0 : i32, i32
  }
  func.func @transform_3(%arg0: i32) -> (i32, i32) {
    %c0_i32 = arith.constant 0 : i32
    %c0_i32_0 = arith.constant 0 : i32
    %c0_i32_1 = arith.constant 0 : i32
    return %c0_i32, %c0_i32_0 : i32, i32
  }
  func.func @transform_4(%arg0: i32) -> (i32, i32) {
    %c0_i32 = arith.constant 0 : i32
    %c0_i32_0 = arith.constant 0 : i32
    %c0_i32_1 = arith.constant 0 : i32
    return %c0_i32, %c0_i32_0 : i32, i32
  }
  func.func @transform_5(%arg0: i32) -> (i32, i32, i32) {
    %c0_i32 = arith.constant 0 : i32
    %c0_i32_0 = arith.constant 0 : i32
    %c0_i32_1 = arith.constant 0 : i32
    return %arg0, %c0_i32, %c0_i32_0 : i32, i32, i32
  }
}

</mosaic_0001>

<llo_original>
// kernel: gat_forward.1
$region0: #{gat_forward.1}
  #allocation0 [shape = 'u32[]', space=smem, size = 0x4, offset = 0x4, fixed_abs, tag = 'smem constant byte address 0x4 - core index']
  #allocation1 [shape = 'u32[72,128]{1,0:T(1,128)}', space=vmem, size = 0x9000, scoped, tag = 'internal scratch']
  %s0 = inlined_call_operand.vmem [shape: f32[2,64,16], index: 0, kind: input, shape index: {}]
  %s1 = inlined_call_operand.vmem [shape: s8[2,64,64], index: 1, kind: input, shape index: {}]
  %s2 = inlined_call_operand.vmem [shape: bf16[16,20], index: 2, kind: input, shape index: {}]
  %s3 = inlined_call_operand.vmem [shape: bf16[16,20], index: 3, kind: input, shape index: {}]
  %s4 = inlined_call_operand.vmem [shape: bf16[16,6], index: 4, kind: input, shape index: {}]
  %s5 = inlined_call_operand.vmem [shape: f32[2,64,4], index: 5, kind: output, shape index: {}]
  %s6 = sld [smem:[#allocation0]]
  $region53: #{gat_forward.1} parent=0
    _
  %s8 = ssub.s32 1, %s6
  %s9 = scalar_select 0, %s8, %s6
  loop: start=0, step=1, limit=4
  $region2: #{gat_forward.1} parent=0 // loop_pre_header
    _
  $region3: #{gat_forward.1} parent=0 // loop_header
    %s11 = sphi 0, %s15
    %p12 = scmp.ge.s32.totalorder %s11, 4
    %s21 = sphi 0, %s23
    %s24 = sphi 0, %s21
    %s25 = sphi 0, %s24
    %s41 = sphi 0, %s25
    %s47 = sphi 0, %s49
    %s50 = sphi 0, %s47
    %s51 = sphi 0, %s50
    %s67 = sphi 0, %s51
    %s71 = sphi 0, %s71
    %s73 = sphi 0, %s71
    %s74 = sphi 0, %s73
    %s88 = sphi 0, %s74
    %s92 = sphi 0, %s92
    %s94 = sphi 0, %s92
    %s95 = sphi 0, %s94
    %s109 = sphi 0, %s95
    %s113 = sphi 0, %s113
    %s115 = sphi 0, %s113
    %s116 = sphi 0, %s115
    %s130 = sphi 0, %s116
    %s136 = sphi 0, %s138
    %s139 = sphi 0, %s136
    %s140 = sphi 0, %s139
    %s156 = sphi 0, %s140
  $region4: #{gat_forward.1} parent=0 // loop_header_branch
    %14 = sbr.rel (%p12) target = $region8
  $region5: #{gat_forward.1} parent=0 // loop_body
    %s16 = ssub.s32 %s11, 1
    %s17 = ssub.s32 %s11, 2
    %s18 = sadd.s32 %s11, 1
    %s19 = ssub.s32 %s11, %s18
    %p20 = scmp.eq.s32.totalorder %s19, 0
    %s22 = sadd.s32 %s21, 1
    %s23 = scalar_select %p20, %s21, %s22
    %p26 = pneg %p20
    %p27 = scmp.eq.s32.totalorder %s11, 1
    %p28 = por %p26, %p27
    %p29 = scmp.ne.s32.totalorder %s21, %s24
    %p30 = scmp.eq.s32.totalorder %s11, 0
    %p31 = por %p29, %p30
    %p32 = scmp.ne.s32.totalorder %s21, %s24
    %p33 = scmp.eq.s32.totalorder %s16, 1
    %p34 = por %p32, %p33
    %p35 = scmp.ne.s32.totalorder %s24, %s25
    %p36 = scmp.eq.s32.totalorder %s16, 0
    %p37 = por %p35, %p36
    %p38 = scmp.ne.s32.totalorder %s24, %s25
    %p39 = scmp.eq.s32.totalorder %s17, 1
    %p40 = por %p38, %p39
    %p42 = scmp.ne.s32.totalorder %s25, %s41
    %p43 = scmp.eq.s32.totalorder %s17, 0
    %p44 = por %p42, %p43
    %s45 = ssub.s32 %s11, %s18
    %p46 = scmp.eq.s32.totalorder %s45, 0
    %s48 = sadd.s32 %s47, 1
    %s49 = scalar_select %p46, %s47, %s48
    %p52 = pneg %p46
    %p53 = scmp.eq.s32.totalorder %s11, 1
    %p54 = por %p52, %p53
    %p55 = scmp.ne.s32.totalorder %s47, %s50
    %p56 = scmp.eq.s32.totalorder %s11, 0
    %p57 = por %p55, %p56
    %p58 = scmp.ne.s32.totalorder %s47, %s50
    %p59 = scmp.eq.s32.totalorder %s16, 1
    %p60 = por %p58, %p59
    %p61 = scmp.ne.s32.totalorder %s50, %s51
    %p62 = scmp.eq.s32.totalorder %s16, 0
    %p63 = por %p61, %p62
    %p64 = scmp.ne.s32.totalorder %s50, %s51
    %p65 = scmp.eq.s32.totalorder %s17, 1
    %p66 = por %p64, %p65
    %p68 = scmp.ne.s32.totalorder %s51, %s67
    %p69 = scmp.eq.s32.totalorder %s17, 0
    %p70 = por %p68, %p69
    %s72 = sadd.s32 %s71, 1
    %p75 = scmp.eq.s32.totalorder %s11, 1
    %p76 = scmp.ne.s32.totalorder %s71, %s73
    %p77 = scmp.eq.s32.totalorder %s11, 0
    %p78 = por %p76, %p77
    %p79 = scmp.ne.s32.totalorder %s71, %s73
    %p80 = scmp.eq.s32.totalorder %s16, 1
    %p81 = por %p79, %p80
    %p82 = scmp.ne.s32.totalorder %s73, %s74
    %p83 = scmp.eq.s32.totalorder %s16, 0
    %p84 = por %p82, %p83
    %p85 = scmp.ne.s32.totalorder %s73, %s74
    %p86 = scmp.eq.s32.totalorder %s17, 1
    %p87 = por %p85, %p86
    %p89 = scmp.ne.s32.totalorder %s74, %s88
    %p90 = scmp.eq.s32.totalorder %s17, 0
    %p91 = por %p89, %p90
    %s93 = sadd.s32 %s92, 1
    %p96 = scmp.eq.s32.totalorder %s11, 1
    %p97 = scmp.ne.s32.totalorder %s92, %s94
    %p98 = scmp.eq.s32.totalorder %s11, 0
    %p99 = por %p97, %p98
    %p100 = scmp.ne.s32.totalorder %s92, %s94
    %p101 = scmp.eq.s32.totalorder %s16, 1
    %p102 = por %p100, %p101
    %p103 = scmp.ne.s32.totalorder %s94, %s95
    %p104 = scmp.eq.s32.totalorder %s16, 0
    %p105 = por %p103, %p104
    %p106 = scmp.ne.s32.totalorder %s94, %s95
    %p107 = scmp.eq.s32.totalorder %s17, 1
    %p108 = por %p106, %p107
    %p110 = scmp.ne.s32.totalorder %s95, %s109
    %p111 = scmp.eq.s32.totalorder %s17, 0
    %p112 = por %p110, %p111
    %s114 = sadd.s32 %s113, 1
    %p117 = scmp.eq.s32.totalorder %s11, 1
    %p118 = scmp.ne.s32.totalorder %s113, %s115
    %p119 = scmp.eq.s32.totalorder %s11, 0
    %p120 = por %p118, %p119
    %p121 = scmp.ne.s32.totalorder %s113, %s115
    %p122 = scmp.eq.s32.totalorder %s16, 1
    %p123 = por %p121, %p122
    %p124 = scmp.ne.s32.totalorder %s115, %s116
    %p125 = scmp.eq.s32.totalorder %s16, 0
    %p126 = por %p124, %p125
    %p127 = scmp.ne.s32.totalorder %s115, %s116
    %p128 = scmp.eq.s32.totalorder %s17, 1
    %p129 = por %p127, %p128
    %p131 = scmp.ne.s32.totalorder %s116, %s130
    %p132 = scmp.eq.s32.totalorder %s17, 0
    %p133 = por %p131, %p132
    %s134 = ssub.s32 %s11, %s18
    %p135 = scmp.eq.s32.totalorder %s134, 0
    %s137 = sadd.s32 %s136, 1
    %s138 = scalar_select %p135, %s136, %s137
    %p141 = pneg %p135
    %p142 = scmp.eq.s32.totalorder %s11, 1
    %p143 = por %p141, %p142
    %p144 = scmp.ne.s32.totalorder %s136, %s139
    %p145 = scmp.eq.s32.totalorder %s11, 0
    %p146 = por %p144, %p145
    %p147 = scmp.ne.s32.totalorder %s136, %s139
    %p148 = scmp.eq.s32.totalorder %s16, 1
    %p149 = por %p147, %p148
    %p150 = scmp.ne.s32.totalorder %s139, %s140
    %p151 = scmp.eq.s32.totalorder %s16, 0
    %p152 = por %p150, %p151
    %p153 = scmp.ne.s32.totalorder %s139, %s140
    %p154 = scmp.eq.s32.totalorder %s17, 1
    %p155 = por %p153, %p154
    %p157 = scmp.ne.s32.totalorder %s140, %s156
    %p158 = scmp.eq.s32.totalorder %s17, 0
    %p159 = por %p157, %p158
    %p160 = scmp.le.s32.totalorder 1, %s11
    %p161 = scmp.lt.s32.totalorder %s11, 3
    %p162 = pnand %p160, %p161
    %p163 = pneg %p162
    // Predicated region
    $region9: #{gat_forward.1} parent=5 // pred_check
      _
    $region10: #{gat_forward.1} parent=5 // pred_check_branch
      %165 = sbr.rel (%p162) target = $region12
    $region11: #{gat_forward.1} parent=5 // pred_region
      %s166 = ssub.s32 %s11, 1
      // Predicated region
      $region13: #{gat_forward.1} parent=11 // pred_check
        %p167 = pneg %p84
      $region14: #{gat_forward.1} parent=11 // pred_check_branch
        %169 = sbr.rel (%p167) target = $region16
      $region15: #{gat_forward.1} parent=11 // pred_region
        _
      $region16: #{gat_forward.1} parent=11 // pred_fallthru
        _
      // Predicated region
      $region17: #{gat_forward.1} parent=11 // pred_check
        %p170 = pneg %p105
      $region18: #{gat_forward.1} parent=11 // pred_check_branch
        %172 = sbr.rel (%p170) target = $region20
      $region19: #{gat_forward.1} parent=11 // pred_region
        _
      $region20: #{gat_forward.1} parent=11 // pred_fallthru
        _
      // Predicated region
      $region21: #{gat_forward.1} parent=11 // pred_check
        %p173 = pneg %p126
      $region22: #{gat_forward.1} parent=11 // pred_check_branch
        %175 = sbr.rel (%p173) target = $region24
      $region23: #{gat_forward.1} parent=11 // pred_region
        _
      $region24: #{gat_forward.1} parent=11 // pred_fallthru
        _
    $region12: #{gat_forward.1} parent=5 // pred_fallthru
      _
    %p176 = scmp.lt.s32.totalorder %s11, 2
    // Predicated region
    $region25: #{gat_forward.1} parent=5 // pred_check
      %p177 = pneg %p176
    $region26: #{gat_forward.1} parent=5 // pred_check_branch
      %179 = sbr.rel (%p177) target = $region28
    $region27: #{gat_forward.1} parent=5 // pred_region
      // Predicated region
      $region29: #{gat_forward.1} parent=27 // pred_check
        %p180 = pneg %p31
      $region30: #{gat_forward.1} parent=27 // pred_check_branch
        %182 = sbr.rel (%p180) target = $region32
      $region31: #{gat_forward.1} parent=27 // pred_region
        %p183 = scmp.lt.s32.totalorder %s11, 1
        %s184 = scalar_select %p183, %s11, 1
        %s185 = smul.addr %s184, 8
        %s186 = smul.addr %s185, 8
        %s187 = scalar_lea.vmem %s0, %s186
      $region32: #{gat_forward.1} parent=27 // pred_fallthru
        _
      // Predicated region
      $region33: #{gat_forward.1} parent=27 // pred_check
        %p188 = pneg %p57
      $region34: #{gat_forward.1} parent=27 // pred_check_branch
        %190 = sbr.rel (%p188) target = $region36
      $region35: #{gat_forward.1} parent=27 // pred_region
        %p191 = scmp.lt.s32.totalorder %s11, 1
        %s192 = scalar_select %p191, %s11, 1
        %s193 = smul.addr %s192, 2
        %s194 = smul.addr %s193, 8
        %s195 = scalar_lea.vmem %s1, %s194
      $region36: #{gat_forward.1} parent=27 // pred_fallthru
        _
    $region28: #{gat_forward.1} parent=5 // pred_fallthru
      _
    %p196 = scmp.le.s32.totalorder 1, %s11
    %p197 = scmp.lt.s32.totalorder %s11, 3
    %p198 = pnand %p196, %p197
    %p199 = pneg %p198
    // Predicated region
    $region37: #{gat_forward.1} parent=5 // pred_check
      _
    $region38: #{gat_forward.1} parent=5 // pred_check_branch
      %201 = sbr.rel (%p198) target = $region40
    $region39: #{gat_forward.1} parent=5 // pred_region
      %s202 = ssub.s32 %s11, 1
      %p203 = scmp.lt.s32.totalorder %s16, 1
      %s204 = scalar_select %p203, %s16, 1
      %s205 = smul.addr %s204, 8
      %s206 = smul.addr %s205, 8
      %s207 = scalar_lea.vmem %s0, %s206
      %p208 = pneg %p37
      %p209 = pneg %p34
      %p210 = scmp.lt.s32.totalorder %s16, 1
      %s211 = scalar_select %p210, %s16, 1
      %s212 = smul.addr %s211, 2
      %s213 = smul.addr %s212, 8
      %s214 = scalar_lea.vmem %s1, %s213
      %p215 = pneg %p63
      %p216 = pneg %p60
      %p217 = pneg %p84
      %p218 = pneg %p81
      %p219 = pneg %p105
      %p220 = pneg %p102
      %p221 = pneg %p126
      %p222 = pneg %p123
      %p223 = pneg %p152
      %p224 = pneg %p149
      %p225 = scmp.lt.s32.totalorder %s16, 1
      %s226 = scalar_select %p225, %s16, 1
      %s227 = smul.addr %s226, 8
      %s228 = smul.addr %s227, 8
      %s229 = scalar_lea.vmem %s5, %s228
      %p230 = scmp.lt.s32.totalorder %s16, 1
      %s231 = scalar_select %p230, %s16, 1
      %s232 = smul.addr %s231, 8
      %s233 = smul.addr %s232, 8
      %s234 = scalar_lea.vmem %s0, %s233
      %p235 = scmp.lt.s32.totalorder %s16, 1
      %s236 = scalar_select %p235, %s16, 1
      %s237 = smul.addr %s236, 2
      %s238 = smul.addr %s237, 8
      %s239 = scalar_lea.vmem %s1, %s238
      %p240 = scmp.lt.s32.totalorder %s16, 1
      %s241 = scalar_select %p240, %s16, 1
      %s242 = smul.addr %s241, 8
      %s243 = smul.addr %s242, 8
      %s244 = scalar_lea.vmem %s5, %s243
      %v246 = vld [vmem:[%s239] sm:$0xff]
      %v247 = vld [vmem:[%s239 + $0x8] sm:$0xff]
      %v248 = vunpack.c.0.s8 %v246
      %v249 = vunpack.c.1.s8 %v246
      %v250 = vunpack.c.2.s8 %v246
      %v251 = vunpack.c.3.s8 %v246
      %v252 = vunpack.c.0.s8 %v247
      %v253 = vunpack.c.1.s8 %v247
      %v254 = vunpack.c.2.s8 %v247
      %v255 = vunpack.c.3.s8 %v247
      %v256 = vcvt.s32.f32 %v248
      %v257 = vcvt.s32.f32 %v249
      %v258 = vcvt.s32.f32 %v250
      %v259 = vcvt.s32.f32 %v251
      %v260 = vcvt.s32.f32 %v252
      %v261 = vcvt.s32.f32 %v253
      %v262 = vcvt.s32.f32 %v254
      %v263 = vcvt.s32.f32 %v255
      %vm264 = vcmp.gt.f32.partialorder %v256, 0.0
      %vm265 = vcmp.gt.f32.partialorder %v257, 0.0
      %vm266 = vcmp.gt.f32.partialorder %v258, 0.0
      %vm267 = vcmp.gt.f32.partialorder %v259, 0.0
      %vm268 = vcmp.gt.f32.partialorder %v260, 0.0
      %vm269 = vcmp.gt.f32.partialorder %v261, 0.0
      %vm270 = vcmp.gt.f32.partialorder %v262, 0.0
      %vm271 = vcmp.gt.f32.partialorder %v263, 0.0
      %v272 = vsel %vm264, 0.0, -1e+30
      %v273 = vsel %vm265, 0.0, -1e+30
      %v274 = vsel %vm266, 0.0, -1e+30
      %v275 = vsel %vm267, 0.0, -1e+30
      %v276 = vsel %vm268, 0.0, -1e+30
      %v277 = vsel %vm269, 0.0, -1e+30
      %v278 = vsel %vm270, 0.0, -1e+30
      %v279 = vsel %vm271, 0.0, -1e+30
      %v280 = vld [vmem:[%s234] sm:$0xff]
      %v281 = vld [vmem:[%s234 + $0x8] sm:$0xff]
      %v282 = vld [vmem:[%s234 + $0x10] sm:$0xff]
      %v283 = vld [vmem:[%s234 + $0x18] sm:$0xff]
      %v284 = vld [vmem:[%s234 + $0x20] sm:$0xff]
      %v285 = vld [vmem:[%s234 + $0x28] sm:$0xff]
      %v286 = vld [vmem:[%s234 + $0x30] sm:$0xff]
      %v287 = vld [vmem:[%s234 + $0x38] sm:$0xff]
      %v288 = vpack.c.bf16 %v281, %v280
      %v289 = vpack.c.bf16 %v283, %v282
      %v290 = vpack.c.bf16 %v285, %v284
      %v291 = vpack.c.bf16 %v287, %v286
      %v292 = vld [vmem:[%s2] sm:$0xf]
      %v293 = vld [vmem:[%s2 + $0x4] sm:$0xf]
      %v296 = vunpack.c.l.b16 %v292
      %v297 = vunpack.c.l.b16 %v293
      %v298 = vpack.c.b16 %v297, %v296
      %vm300 = vcmask 130048
      %v302 = vsel %vm300, %v288, 0
      %v305 = vsel %vm300, %v289, 0
      %v308 = vsel %vm300, %v290, 0
      %v311 = vsel %vm300, %v291, 0
      %313 = vmatpush.bf16.msra.mxu0 0
      %314 = vmatpush.bf16.msra.mxu0 0
      %315 = vmatpush.bf16.msra.mxu0 0
      %316 = vmatpush.bf16.msra.mxu0 0
      %317 = vmatpush.bf16.msra.mxu0 0
      %318 = vmatpush.bf16.msra.mxu0 0
      %319 = vmatpush.bf16.msra.mxu0 0
      %320 = vmatpush.bf16.msra.mxu0 %v298
      %321 = vmatmul.bf16.gmra.mxu0 %v302
      %v322 = vpop.f32.mrf.mxu0
      %v323 = vadd.f32 0.0, %v322
      %v324 = vpop.f32.mrf.mxu0
      %v325 = vadd.f32 0.0, %v324
      %326 = vmatmul.bf16.gmra.mxu0 %v305
      %v327 = vpop.f32.mrf.mxu0
      %v328 = vadd.f32 0.0, %v327
      %v329 = vpop.f32.mrf.mxu0
      %v330 = vadd.f32 0.0, %v329
      %331 = vmatmul.bf16.gmra.mxu0 %v308
      %v332 = vpop.f32.mrf.mxu0
      %v333 = vadd.f32 0.0, %v332
      %v334 = vpop.f32.mrf.mxu0
      %v335 = vadd.f32 0.0, %v334
      %336 = vmatmul.bf16.gmra.mxu0 %v311
      %v337 = vpop.f32.mrf.mxu0
      %v338 = vadd.f32 0.0, %v337
      %v339 = vpop.f32.mrf.mxu0
      %v340 = vadd.f32 0.0, %v339
      %341 = vdwg.mxu0
      %350 = vrot.lane.b32.xlu0 %v323, 112
      %v351 = vpop.permute.xlu0 %350
      %352 = vrot.lane.b32.xlu0 %v325, 112
      %v353 = vpop.permute.xlu0 %352
      %354 = vrot.lane.b32.xlu0 %v328, 112
      %v355 = vpop.permute.xlu0 %354
      %356 = vrot.lane.b32.xlu0 %v330, 112
      %v357 = vpop.permute.xlu0 %356
      %358 = vrot.lane.b32.xlu0 %v333, 112
      %v359 = vpop.permute.xlu0 %358
      %360 = vrot.lane.b32.xlu0 %v335, 112
      %v361 = vpop.permute.xlu0 %360
      %362 = vrot.lane.b32.xlu0 %v338, 112
      %v363 = vpop.permute.xlu0 %362
      %364 = vrot.lane.b32.xlu0 %v340, 112
      %v365 = vpop.permute.xlu0 %364
      %374 = vxpose.xlu0.b32.start [1/16] %v351, 128
      %375 = vxpose.xlu0.b32.cont [2/16] %v353, 128
      %376 = vxpose.xlu0.b32.cont [3/16] %v355, 128
      %377 = vxpose.xlu0.b32.cont [4/16] %v357, 128
      %378 = vxpose.xlu0.b32.cont [5/16] %v359, 128
      %379 = vxpose.xlu0.b32.cont [6/16] %v361, 128
      %380 = vxpose.xlu0.b32.cont [7/16] %v363, 128
      %381 = vxpose.xlu0.b32.cont [8/16] %v365, 128
      %382 = vxpose.xlu0.b32.cont [9/16] 0.0, 128
      %383 = vxpose.xlu0.b32.cont [10/16] 0.0, 128
      %384 = vxpose.xlu0.b32.cont [11/16] 0.0, 128
      %385 = vxpose.xlu0.b32.cont [12/16] 0.0, 128
      %386 = vxpose.xlu0.b32.cont [13/16] 0.0, 128
      %387 = vxpose.xlu0.b32.cont [14/16] 0.0, 128
      %388 = vxpose.xlu0.b32.cont [15/16] 0.0, 128
      %389 = vxpose.xlu0.b32.end [16/16] 0.0, 128
      %v390 = vpop.trf.xlu0
      %v391 = vpop.trf.xlu0
      %v392 = vpop.trf.xlu0
      %v393 = vpop.trf.xlu0
      %v394 = vpop.trf.xlu0
      %v395 = vpop.trf.xlu0
      %v396 = vpop.trf.xlu0
      %v397 = vpop.trf.xlu0
      %v398 = vpop.trf.xlu0
      %v399 = vpop.trf.xlu0
      %v400 = vpop.trf.xlu0
      %v401 = vpop.trf.xlu0
      %v402 = vpop.trf.xlu0
      %v403 = vpop.trf.xlu0
      %v404 = vpop.trf.xlu0
      %v405 = vpop.trf.xlu0
      %406 = vset.pattern.permute.xlu0 18
      %407 = vperm.xlu0 %406, %v323
      %v408 = vpop.permute.xlu0 %407
      %410 = vset.pattern.permute.xlu0 18
      %411 = vperm.xlu0 %410, %v325
      %v412 = vpop.permute.xlu0 %411
      %414 = vset.pattern.permute.xlu0 18
      %415 = vperm.xlu0 %414, %v328
      %v416 = vpop.permute.xlu0 %415
      %418 = vset.pattern.permute.xlu0 18
      %419 = vperm.xlu0 %418, %v330
      %v420 = vpop.permute.xlu0 %419
      %422 = vset.pattern.permute.xlu0 18
      %423 = vperm.xlu0 %422, %v333
      %v424 = vpop.permute.xlu0 %423
      %426 = vset.pattern.permute.xlu0 18
      %427 = vperm.xlu0 %426, %v335
      %v428 = vpop.permute.xlu0 %427
      %430 = vset.pattern.permute.xlu0 18
      %431 = vperm.xlu0 %430, %v338
      %v432 = vpop.permute.xlu0 %431
      %434 = vset.pattern.permute.xlu0 18
      %435 = vperm.xlu0 %434, %v340
      %v436 = vpop.permute.xlu0 %435
      %v438 = vperm.slane %v390, 0
      %v439 = vadd.f32 %v408, %v438
      %v440 = vadd.f32 %v412, %v438
      %v441 = vadd.f32 %v416, %v438
      %v442 = vadd.f32 %v420, %v438
      %v443 = vadd.f32 %v424, %v438
      %v444 = vadd.f32 %v428, %v438
      %v445 = vadd.f32 %v432, %v438
      %v446 = vadd.f32 %v436, %v438
      %447 = vset.pattern.permute.xlu0 19
      %448 = vperm.xlu0 %447, %v323
      %v449 = vpop.permute.xlu0 %448
      %451 = vset.pattern.permute.xlu0 19
      %452 = vperm.xlu0 %451, %v325
      %v453 = vpop.permute.xlu0 %452
      %455 = vset.pattern.permute.xlu0 19
      %456 = vperm.xlu0 %455, %v328
      %v457 = vpop.permute.xlu0 %456
      %459 = vset.pattern.permute.xlu0 19
      %460 = vperm.xlu0 %459, %v330
      %v461 = vpop.permute.xlu0 %460
      %463 = vset.pattern.permute.xlu0 19
      %464 = vperm.xlu0 %463, %v333
      %v465 = vpop.permute.xlu0 %464
      %467 = vset.pattern.permute.xlu0 19
      %468 = vperm.xlu0 %467, %v335
      %v469 = vpop.permute.xlu0 %468
      %471 = vset.pattern.permute.xlu0 19
      %472 = vperm.xlu0 %471, %v338
      %v473 = vpop.permute.xlu0 %472
      %475 = vset.pattern.permute.xlu0 19
      %476 = vperm.xlu0 %475, %v340
      %v477 = vpop.permute.xlu0 %476
      %v479 = vperm.slane %v390, 1
      %v480 = vadd.f32 %v449, %v479
      %v481 = vadd.f32 %v453, %v479
      %v482 = vadd.f32 %v457, %v479
      %v483 = vadd.f32 %v461, %v479
      %v484 = vadd.f32 %v465, %v479
      %v485 = vadd.f32 %v469, %v479
      %v486 = vadd.f32 %v473, %v479
      %v487 = vadd.f32 %v477, %v479
      %496 = vrot.lane.b32.xlu0 %v480, 64
      %v497 = vpop.permute.xlu0 %496
      %498 = vrot.lane.b32.xlu0 %v481, 64
      %v499 = vpop.permute.xlu0 %498
      %500 = vrot.lane.b32.xlu0 %v482, 64
      %v501 = vpop.permute.xlu0 %500
      %502 = vrot.lane.b32.xlu0 %v483, 64
      %v503 = vpop.permute.xlu0 %502
      %504 = vrot.lane.b32.xlu0 %v484, 64
      %v505 = vpop.permute.xlu0 %504
      %506 = vrot.lane.b32.xlu0 %v485, 64
      %v507 = vpop.permute.xlu0 %506
      %508 = vrot.lane.b32.xlu0 %v486, 64
      %v509 = vpop.permute.xlu0 %508
      %510 = vrot.lane.b32.xlu0 %v487, 64
      %v511 = vpop.permute.xlu0 %510
      %vm520 = vcmask 523264
      %v521 = vsel %vm520, %v439, %v497
      %v522 = vsel %vm520, %v440, %v499
      %v523 = vsel %vm520, %v441, %v501
      %v524 = vsel %vm520, %v442, %v503
      %v525 = vsel %vm520, %v443, %v505
      %v526 = vsel %vm520, %v444, %v507
      %v527 = vsel %vm520, %v445, %v509
      %v528 = vsel %vm520, %v446, %v511
      %v529 = vmul.f32 %v521, 0.2
      %v530 = vmul.f32 %v522, 0.2
      %v531 = vmul.f32 %v523, 0.2
      %v532 = vmul.f32 %v524, 0.2
      %v533 = vmul.f32 %v525, 0.2
      %v534 = vmul.f32 %v526, 0.2
      %v535 = vmul.f32 %v527, 0.2
      %v536 = vmul.f32 %v528, 0.2
      %v537 = vmax.f32 %v521, %v529
      %v538 = vmax.f32 %v522, %v530
      %v539 = vmax.f32 %v523, %v531
      %v540 = vmax.f32 %v524, %v532
      %v541 = vmax.f32 %v525, %v533
      %v542 = vmax.f32 %v526, %v534
      %v543 = vmax.f32 %v527, %v535
      %v544 = vmax.f32 %v528, %v536
      %553 = vrot.lane.b32.xlu0 %v272, 64
      %v554 = vpop.permute.xlu0 %553
      %555 = vrot.lane.b32.xlu0 %v273, 64
      %v556 = vpop.permute.xlu0 %555
      %557 = vrot.lane.b32.xlu0 %v274, 64
      %v558 = vpop.permute.xlu0 %557
      %559 = vrot.lane.b32.xlu0 %v275, 64
      %v560 = vpop.permute.xlu0 %559
      %561 = vrot.lane.b32.xlu0 %v276, 64
      %v562 = vpop.permute.xlu0 %561
      %563 = vrot.lane.b32.xlu0 %v277, 64
      %v564 = vpop.permute.xlu0 %563
      %565 = vrot.lane.b32.xlu0 %v278, 64
      %v566 = vpop.permute.xlu0 %565
      %567 = vrot.lane.b32.xlu0 %v279, 64
      %v568 = vpop.permute.xlu0 %567
      %v577 = vsel %vm520, %v272, %v554
      %v578 = vsel %vm520, %v273, %v556
      %v579 = vsel %vm520, %v274, %v558
      %v580 = vsel %vm520, %v275, %v560
      %v581 = vsel %vm520, %v276, %v562
      %v582 = vsel %vm520, %v277, %v564
      %v583 = vsel %vm520, %v278, %v566
      %v584 = vsel %vm520, %v279, %v568
      %v585 = vadd.f32 %v537, %v577
      %v586 = vadd.f32 %v538, %v578
      %v587 = vadd.f32 %v539, %v579
      %v588 = vadd.f32 %v540, %v580
      %v589 = vadd.f32 %v541, %v581
      %v590 = vadd.f32 %v542, %v582
      %v591 = vadd.f32 %v543, %v583
      %v592 = vadd.f32 %v544, %v584
      %593 = vmax.xlane.f32.xlu0 %v585
      %v594 = vpop.xlane.xlu0 %593
      %595 = vmax.xlane.f32.xlu0 %v586
      %v596 = vpop.xlane.xlu0 %595
      %597 = vmax.xlane.f32.xlu0 %v587
      %v598 = vpop.xlane.xlu0 %597
      %599 = vmax.xlane.f32.xlu0 %v588
      %v600 = vpop.xlane.xlu0 %599
      %601 = vmax.xlane.f32.xlu0 %v589
      %v602 = vpop.xlane.xlu0 %601
      %603 = vmax.xlane.f32.xlu0 %v590
      %v604 = vpop.xlane.xlu0 %603
      %605 = vmax.xlane.f32.xlu0 %v591
      %v606 = vpop.xlane.xlu0 %605
      %607 = vmax.xlane.f32.xlu0 %v592
      %v608 = vpop.xlane.xlu0 %607
      %v609 = vsub.f32 %v585, %v594
      %v610 = vsub.f32 %v586, %v596
      %v611 = vsub.f32 %v587, %v598
      %v612 = vsub.f32 %v588, %v600
      %v613 = vsub.f32 %v589, %v602
      %v614 = vsub.f32 %v590, %v604
      %v615 = vsub.f32 %v591, %v606
      %v616 = vsub.f32 %v592, %v608
      %v617 = vmul.f32 %v609, 1.442695
      %v618 = vpow.pop %v617
      %v619 = vmul.f32 %v610, 1.442695
      %v620 = vpow.pop %v619
      %v621 = vmul.f32 %v611, 1.442695
      %v622 = vpow.pop %v621
      %v623 = vmul.f32 %v612, 1.442695
      %v624 = vpow.pop %v623
      %v625 = vmul.f32 %v613, 1.442695
      %v626 = vpow.pop %v625
      %v627 = vmul.f32 %v614, 1.442695
      %v628 = vpow.pop %v627
      %v629 = vmul.f32 %v615, 1.442695
      %v630 = vpow.pop %v629
      %v631 = vmul.f32 %v616, 1.442695
      %v632 = vpow.pop %v631
      %v633 = vsel %vm520, %v618, 0.0
      %634 = vadd.xlane.f32.xlu0 %v633
      %v635 = vpop.xlane.xlu0 %634
      %v636 = vsel %vm520, %v620, 0.0
      %637 = vadd.xlane.f32.xlu0 %v636
      %v638 = vpop.xlane.xlu0 %637
      %v639 = vsel %vm520, %v622, 0.0
      %640 = vadd.xlane.f32.xlu0 %v639
      %v641 = vpop.xlane.xlu0 %640
      %v642 = vsel %vm520, %v624, 0.0
      %643 = vadd.xlane.f32.xlu0 %v642
      %v644 = vpop.xlane.xlu0 %643
      %v645 = vsel %vm520, %v626, 0.0
      %646 = vadd.xlane.f32.xlu0 %v645
      %v647 = vpop.xlane.xlu0 %646
      %v648 = vsel %vm520, %v628, 0.0
      %649 = vadd.xlane.f32.xlu0 %v648
      %v650 = vpop.xlane.xlu0 %649
      %v651 = vsel %vm520, %v630, 0.0
      %652 = vadd.xlane.f32.xlu0 %v651
      %v653 = vpop.xlane.xlu0 %652
      %v654 = vsel %vm520, %v632, 0.0
      %655 = vadd.xlane.f32.xlu0 %v654
      %v656 = vpop.xlane.xlu0 %655
      %v657 = vpack.c.bf16 %v620, %v618
      %v658 = vpack.c.bf16 %v624, %v622
      %v659 = vpack.c.bf16 %v628, %v626
      %v660 = vpack.c.bf16 %v632, %v630
      %v661 = vpack.c.bf16 %v325, %v323
      %v662 = vpack.c.bf16 %v330, %v328
      %v663 = vpack.c.bf16 %v335, %v333
      %v664 = vpack.c.bf16 %v340, %v338
      %v666 = vsel %vm520, %v657, 0
      %v669 = vsel %vm520, %v658, 0
      %v672 = vsel %vm520, %v659, 0
      %v675 = vsel %vm520, %v660, 0
      %677 = vmatpush.bf16.msra.mxu0 0
      %678 = vmatpush.bf16.msra.mxu0 0
      %679 = vmatpush.bf16.msra.mxu0 0
      %680 = vmatpush.bf16.msra.mxu0 0
      %681 = vmatpush.bf16.msra.mxu0 %v664
      %682 = vmatpush.bf16.msra.mxu0 %v663
      %683 = vmatpush.bf16.msra.mxu0 %v662
      %684 = vmatpush.bf16.msra.mxu0 %v661
      %685 = vmatmul.bf16.gmra.mxu0 %v666
      %v686 = vpop.f32.mrf.mxu0
      %v687 = vadd.f32 0.0, %v686
      %v688 = vpop.f32.mrf.mxu0
      %v689 = vadd.f32 0.0, %v688
      %690 = vmatmul.bf16.gmra.mxu0 %v669
      %v691 = vpop.f32.mrf.mxu0
      %v692 = vadd.f32 0.0, %v691
      %v693 = vpop.f32.mrf.mxu0
      %v694 = vadd.f32 0.0, %v693
      %695 = vmatmul.bf16.gmra.mxu0 %v672
      %v696 = vpop.f32.mrf.mxu0
      %v697 = vadd.f32 0.0, %v696
      %v698 = vpop.f32.mrf.mxu0
      %v699 = vadd.f32 0.0, %v698
      %700 = vmatmul.bf16.gmra.mxu0 %v675
      %v701 = vpop.f32.mrf.mxu0
      %v702 = vadd.f32 0.0, %v701
      %v703 = vpop.f32.mrf.mxu0
      %v704 = vadd.f32 0.0, %v703
      %705 = vdwg.mxu0
      %v706 = vmax.f32 %v635, 1e-20
      %v707 = vmax.f32 %v638, 1e-20
      %v708 = vmax.f32 %v641, 1e-20
      %v709 = vmax.f32 %v644, 1e-20
      %v710 = vmax.f32 %v647, 1e-20
      %v711 = vmax.f32 %v650, 1e-20
      %v712 = vmax.f32 %v653, 1e-20
      %v713 = vmax.f32 %v656, 1e-20
      %v714 = vrcp.pop %v706
      %v715 = vrcp.pop %v707
      %v716 = vrcp.pop %v708
      %v717 = vrcp.pop %v709
      %v718 = vrcp.pop %v710
      %v719 = vrcp.pop %v711
      %v720 = vrcp.pop %v712
      %v721 = vrcp.pop %v713
      %v722 = vmul.f32 %v687, %v714
      %v723 = vmul.f32 %v689, %v715
      %v724 = vmul.f32 %v692, %v716
      %v725 = vmul.f32 %v694, %v717
      %v726 = vmul.f32 %v697, %v718
      %v727 = vmul.f32 %v699, %v719
      %v728 = vmul.f32 %v702, %v720
      %v729 = vmul.f32 %v704, %v721
      %738 = vrot.lane.b32.xlu0 %v618, 64
      %v739 = vpop.permute.xlu0 %738
      %740 = vrot.lane.b32.xlu0 %v620, 64
      %v741 = vpop.permute.xlu0 %740
      %742 = vrot.lane.b32.xlu0 %v622, 64
      %v743 = vpop.permute.xlu0 %742
      %744 = vrot.lane.b32.xlu0 %v624, 64
      %v745 = vpop.permute.xlu0 %744
      %746 = vrot.lane.b32.xlu0 %v626, 64
      %v747 = vpop.permute.xlu0 %746
      %748 = vrot.lane.b32.xlu0 %v628, 64
      %v749 = vpop.permute.xlu0 %748
      %750 = vrot.lane.b32.xlu0 %v630, 64
      %v751 = vpop.permute.xlu0 %750
      %752 = vrot.lane.b32.xlu0 %v632, 64
      %v753 = vpop.permute.xlu0 %752
      %v762 = vsel %vm520, %v739, 0.0
      %763 = vadd.xlane.f32.xlu0 %v762
      %v764 = vpop.xlane.xlu0 %763
      %v765 = vsel %vm520, %v741, 0.0
      %766 = vadd.xlane.f32.xlu0 %v765
      %v767 = vpop.xlane.xlu0 %766
      %v768 = vsel %vm520, %v743, 0.0
      %769 = vadd.xlane.f32.xlu0 %v768
      %v770 = vpop.xlane.xlu0 %769
      %v771 = vsel %vm520, %v745, 0.0
      %772 = vadd.xlane.f32.xlu0 %v771
      %v773 = vpop.xlane.xlu0 %772
      %v774 = vsel %vm520, %v747, 0.0
      %775 = vadd.xlane.f32.xlu0 %v774
      %v776 = vpop.xlane.xlu0 %775
      %v777 = vsel %vm520, %v749, 0.0
      %778 = vadd.xlane.f32.xlu0 %v777
      %v779 = vpop.xlane.xlu0 %778
      %v780 = vsel %vm520, %v751, 0.0
      %781 = vadd.xlane.f32.xlu0 %v780
      %v782 = vpop.xlane.xlu0 %781
      %v783 = vsel %vm520, %v753, 0.0
      %784 = vadd.xlane.f32.xlu0 %v783
      %v785 = vpop.xlane.xlu0 %784
      %790 = vrot.lane.b32.xlu0 %v657, 64
      %v791 = vpop.permute.xlu0 %790
      %792 = vrot.lane.b32.xlu0 %v658, 64
      %v793 = vpop.permute.xlu0 %792
      %794 = vrot.lane.b32.xlu0 %v659, 64
      %v795 = vpop.permute.xlu0 %794
      %796 = vrot.lane.b32.xlu0 %v660, 64
      %v797 = vpop.permute.xlu0 %796
      %802 = vrot.lane.b32.xlu0 %v661, 120
      %v803 = vpop.permute.xlu0 %802
      %804 = vrot.lane.b32.xlu0 %v662, 120
      %v805 = vpop.permute.xlu0 %804
      %806 = vrot.lane.b32.xlu0 %v663, 120
      %v807 = vpop.permute.xlu0 %806
      %808 = vrot.lane.b32.xlu0 %v664, 120
      %v809 = vpop.permute.xlu0 %808
      %v815 = vsel %vm520, %v791, 0
      %v818 = vsel %vm520, %v793, 0
      %v821 = vsel %vm520, %v795, 0
      %v824 = vsel %vm520, %v797, 0
      %826 = vmatpush.bf16.msra.mxu0 0
      %827 = vmatpush.bf16.msra.mxu0 0
      %828 = vmatpush.bf16.msra.mxu0 0
      %829 = vmatpush.bf16.msra.mxu0 0
      %830 = vmatpush.bf16.msra.mxu0 %v809
      %831 = vmatpush.bf16.msra.mxu0 %v807
      %832 = vmatpush.bf16.msra.mxu0 %v805
      %833 = vmatpush.bf16.msra.mxu0 %v803
      %834 = vmatmul.bf16.gmra.mxu0 %v815
      %v835 = vpop.f32.mrf.mxu0
      %v836 = vadd.f32 0.0, %v835
      %v837 = vpop.f32.mrf.mxu0
      %v838 = vadd.f32 0.0, %v837
      %839 = vmatmul.bf16.gmra.mxu0 %v818
      %v840 = vpop.f32.mrf.mxu0
      %v841 = vadd.f32 0.0, %v840
      %v842 = vpop.f32.mrf.mxu0
      %v843 = vadd.f32 0.0, %v842
      %844 = vmatmul.bf16.gmra.mxu0 %v821
      %v845 = vpop.f32.mrf.mxu0
      %v846 = vadd.f32 0.0, %v845
      %v847 = vpop.f32.mrf.mxu0
      %v848 = vadd.f32 0.0, %v847
      %849 = vmatmul.bf16.gmra.mxu0 %v824
      %v850 = vpop.f32.mrf.mxu0
      %v851 = vadd.f32 0.0, %v850
      %v852 = vpop.f32.mrf.mxu0
      %v853 = vadd.f32 0.0, %v852
      %854 = vdwg.mxu0
      %v855 = vmax.f32 %v764, 1e-20
      %v856 = vmax.f32 %v767, 1e-20
      %v857 = vmax.f32 %v770, 1e-20
      %v858 = vmax.f32 %v773, 1e-20
      %v859 = vmax.f32 %v776, 1e-20
      %v860 = vmax.f32 %v779, 1e-20
      %v861 = vmax.f32 %v782, 1e-20
      %v862 = vmax.f32 %v785, 1e-20
      %v863 = vrcp.pop %v855
      %v864 = vrcp.pop %v856
      %v865 = vrcp.pop %v857
      %v866 = vrcp.pop %v858
      %v867 = vrcp.pop %v859
      %v868 = vrcp.pop %v860
      %v869 = vrcp.pop %v861
      %v870 = vrcp.pop %v862
      %v871 = vmul.f32 %v836, %v863
      %v872 = vmul.f32 %v838, %v864
      %v873 = vmul.f32 %v841, %v865
      %v874 = vmul.f32 %v843, %v866
      %v875 = vmul.f32 %v846, %v867
      %v876 = vmul.f32 %v848, %v868
      %v877 = vmul.f32 %v851, %v869
      %v878 = vmul.f32 %v853, %v870
      %887 = vrot.lane.b32.xlu0 %v871, 8
      %v888 = vpop.permute.xlu0 %887
      %889 = vrot.lane.b32.xlu0 %v872, 8
      %v890 = vpop.permute.xlu0 %889
      %891 = vrot.lane.b32.xlu0 %v873, 8
      %v892 = vpop.permute.xlu0 %891
      %893 = vrot.lane.b32.xlu0 %v874, 8
      %v894 = vpop.permute.xlu0 %893
      %895 = vrot.lane.b32.xlu0 %v875, 8
      %v896 = vpop.permute.xlu0 %895
      %897 = vrot.lane.b32.xlu0 %v876, 8
      %v898 = vpop.permute.xlu0 %897
      %899 = vrot.lane.b32.xlu0 %v877, 8
      %v900 = vpop.permute.xlu0 %899
      %901 = vrot.lane.b32.xlu0 %v878, 8
      %v902 = vpop.permute.xlu0 %901
      %vm911 = vcmask 64512
      %v912 = vsel %vm911, %v722, %v888
      %v913 = vsel %vm911, %v723, %v890
      %v914 = vsel %vm911, %v724, %v892
      %v915 = vsel %vm911, %v725, %v894
      %v916 = vsel %vm911, %v726, %v896
      %v917 = vsel %vm911, %v727, %v898
      %v918 = vsel %vm911, %v728, %v900
      %v919 = vsel %vm911, %v729, %v902
      %vm920 = vcmp.gt.f32.partialorder %v912, 0.0
      %vm921 = vcmp.gt.f32.partialorder %v913, 0.0
      %vm922 = vcmp.gt.f32.partialorder %v914, 0.0
      %vm923 = vcmp.gt.f32.partialorder %v915, 0.0
      %vm924 = vcmp.gt.f32.partialorder %v916, 0.0
      %vm925 = vcmp.gt.f32.partialorder %v917, 0.0
      %vm926 = vcmp.gt.f32.partialorder %v918, 0.0
      %vm927 = vcmp.gt.f32.partialorder %v919, 0.0
      %v928 = vmin.f32 %v912, 0.0
      %v929 = vmin.f32 %v913, 0.0
      %v930 = vmin.f32 %v914, 0.0
      %v931 = vmin.f32 %v915, 0.0
      %v932 = vmin.f32 %v916, 0.0
      %v933 = vmin.f32 %v917, 0.0
      %v934 = vmin.f32 %v918, 0.0
      %v935 = vmin.f32 %v919, 0.0
      %v936 = vmul.f32 %v928, 1.442695
      %v937 = vpow.pop %v936
      %v938 = vmul.f32 %v929, 1.442695
      %v939 = vpow.pop %v938
      %v940 = vmul.f32 %v930, 1.442695
      %v941 = vpow.pop %v940
      %v942 = vmul.f32 %v931, 1.442695
      %v943 = vpow.pop %v942
      %v944 = vmul.f32 %v932, 1.442695
      %v945 = vpow.pop %v944
      %v946 = vmul.f32 %v933, 1.442695
      %v947 = vpow.pop %v946
      %v948 = vmul.f32 %v934, 1.442695
      %v949 = vpow.pop %v948
      %v950 = vmul.f32 %v935, 1.442695
      %v951 = vpow.pop %v950
      %v952 = vsub.f32 %v937, 1.0
      %v953 = vsub.f32 %v939, 1.0
      %v954 = vsub.f32 %v941, 1.0
      %v955 = vsub.f32 %v943, 1.0
      %v956 = vsub.f32 %v945, 1.0
      %v957 = vsub.f32 %v947, 1.0
      %v958 = vsub.f32 %v949, 1.0
      %v959 = vsub.f32 %v951, 1.0
      %v960 = vsel %vm920, %v912, %v952
      %v961 = vsel %vm921, %v913, %v953
      %v962 = vsel %vm922, %v914, %v954
      %v963 = vsel %vm923, %v915, %v955
      %v964 = vsel %vm924, %v916, %v956
      %v965 = vsel %vm925, %v917, %v957
      %v966 = vsel %vm926, %v918, %v958
      %v967 = vsel %vm927, %v919, %v959
      %v968 = vpack.c.bf16 %v961, %v960
      %v969 = vpack.c.bf16 %v963, %v962
      %v970 = vpack.c.bf16 %v965, %v964
      %v971 = vpack.c.bf16 %v967, %v966
      %v972 = vld [vmem:[%s3] sm:$0xf]
      %v973 = vld [vmem:[%s3 + $0x4] sm:$0xf]
      %v976 = vunpack.c.l.b16 %v972
      %v977 = vunpack.c.l.b16 %v973
      %v978 = vpack.c.b16 %v977, %v976
      %v981 = vsel %vm300, %v968, 0
      %v984 = vsel %vm300, %v969, 0
      %v987 = vsel %vm300, %v970, 0
      %v990 = vsel %vm300, %v971, 0
      %992 = vmatpush.bf16.msra.mxu0 0
      %993 = vmatpush.bf16.msra.mxu0 0
      %994 = vmatpush.bf16.msra.mxu0 0
      %995 = vmatpush.bf16.msra.mxu0 0
      %996 = vmatpush.bf16.msra.mxu0 0
      %997 = vmatpush.bf16.msra.mxu0 0
      %998 = vmatpush.bf16.msra.mxu0 0
      %999 = vmatpush.bf16.msra.mxu0 %v978
      %1000 = vmatmul.bf16.gmra.mxu0 %v981
      %v1001 = vpop.f32.mrf.mxu0
      %v1002 = vadd.f32 0.0, %v1001
      %v1003 = vpop.f32.mrf.mxu0
      %v1004 = vadd.f32 0.0, %v1003
      %1005 = vmatmul.bf16.gmra.mxu0 %v984
      %v1006 = vpop.f32.mrf.mxu0
      %v1007 = vadd.f32 0.0, %v1006
      %v1008 = vpop.f32.mrf.mxu0
      %v1009 = vadd.f32 0.0, %v1008
      %1010 = vmatmul.bf16.gmra.mxu0 %v987
      %v1011 = vpop.f32.mrf.mxu0
      %v1012 = vadd.f32 0.0, %v1011
      %v1013 = vpop.f32.mrf.mxu0
      %v1014 = vadd.f32 0.0, %v1013
      %1015 = vmatmul.bf16.gmra.mxu0 %v990
      %v1016 = vpop.f32.mrf.mxu0
      %v1017 = vadd.f32 0.0, %v1016
      %v1018 = vpop.f32.mrf.mxu0
      %v1019 = vadd.f32 0.0, %v1018
      %1020 = vdwg.mxu0
      %1029 = vrot.lane.b32.xlu0 %v1002, 112
      %v1030 = vpop.permute.xlu0 %1029
      %1031 = vrot.lane.b32.xlu0 %v1004, 112
      %v1032 = vpop.permute.xlu0 %1031
      %1033 = vrot.lane.b32.xlu0 %v1007, 112
      %v1034 = vpop.permute.xlu0 %1033
      %1035 = vrot.lane.b32.xlu0 %v1009, 112
      %v1036 = vpop.permute.xlu0 %1035
      %1037 = vrot.lane.b32.xlu0 %v1012, 112
      %v1038 = vpop.permute.xlu0 %1037
      %1039 = vrot.lane.b32.xlu0 %v1014, 112
      %v1040 = vpop.permute.xlu0 %1039
      %1041 = vrot.lane.b32.xlu0 %v1017, 112
      %v1042 = vpop.permute.xlu0 %1041
      %1043 = vrot.lane.b32.xlu0 %v1019, 112
      %v1044 = vpop.permute.xlu0 %1043
      %1053 = vxpose.xlu0.b32.start [1/16] %v1030, 128
      %1054 = vxpose.xlu0.b32.cont [2/16] %v1032, 128
      %1055 = vxpose.xlu0.b32.cont [3/16] %v1034, 128
      %1056 = vxpose.xlu0.b32.cont [4/16] %v1036, 128
      %1057 = vxpose.xlu0.b32.cont [5/16] %v1038, 128
      %1058 = vxpose.xlu0.b32.cont [6/16] %v1040, 128
      %1059 = vxpose.xlu0.b32.cont [7/16] %v1042, 128
      %1060 = vxpose.xlu0.b32.cont [8/16] %v1044, 128
      %1061 = vxpose.xlu0.b32.cont [9/16] 0.0, 128
      %1062 = vxpose.xlu0.b32.cont [10/16] 0.0, 128
      %1063 = vxpose.xlu0.b32.cont [11/16] 0.0, 128
      %1064 = vxpose.xlu0.b32.cont [12/16] 0.0, 128
      %1065 = vxpose.xlu0.b32.cont [13/16] 0.0, 128
      %1066 = vxpose.xlu0.b32.cont [14/16] 0.0, 128
      %1067 = vxpose.xlu0.b32.cont [15/16] 0.0, 128
      %1068 = vxpose.xlu0.b32.end [16/16] 0.0, 128
      %v1069 = vpop.trf.xlu0
      %v1070 = vpop.trf.xlu0
      %v1071 = vpop.trf.xlu0
      %v1072 = vpop.trf.xlu0
      %v1073 = vpop.trf.xlu0
      %v1074 = vpop.trf.xlu0
      %v1075 = vpop.trf.xlu0
      %v1076 = vpop.trf.xlu0
      %v1077 = vpop.trf.xlu0
      %v1078 = vpop.trf.xlu0
      %v1079 = vpop.trf.xlu0
      %v1080 = vpop.trf.xlu0
      %v1081 = vpop.trf.xlu0
      %v1082 = vpop.trf.xlu0
      %v1083 = vpop.trf.xlu0
      %v1084 = vpop.trf.xlu0
      %1085 = vset.pattern.permute.xlu0 18
      %1086 = vperm.xlu0 %1085, %v1002
      %v1087 = vpop.permute.xlu0 %1086
      %1089 = vset.pattern.permute.xlu0 18
      %1090 = vperm.xlu0 %1089, %v1004
      %v1091 = vpop.permute.xlu0 %1090
      %1093 = vset.pattern.permute.xlu0 18
      %1094 = vperm.xlu0 %1093, %v1007
      %v1095 = vpop.permute.xlu0 %1094
      %1097 = vset.pattern.permute.xlu0 18
      %1098 = vperm.xlu0 %1097, %v1009
      %v1099 = vpop.permute.xlu0 %1098
      %1101 = vset.pattern.permute.xlu0 18
      %1102 = vperm.xlu0 %1101, %v1012
      %v1103 = vpop.permute.xlu0 %1102
      %1105 = vset.pattern.permute.xlu0 18
      %1106 = vperm.xlu0 %1105, %v1014
      %v1107 = vpop.permute.xlu0 %1106
      %1109 = vset.pattern.permute.xlu0 18
      %1110 = vperm.xlu0 %1109, %v1017
      %v1111 = vpop.permute.xlu0 %1110
      %1113 = vset.pattern.permute.xlu0 18
      %1114 = vperm.xlu0 %1113, %v1019
      %v1115 = vpop.permute.xlu0 %1114
      %v1117 = vperm.slane %v1069, 0
      %v1118 = vadd.f32 %v1087, %v1117
      %v1119 = vadd.f32 %v1091, %v1117
      %v1120 = vadd.f32 %v1095, %v1117
      %v1121 = vadd.f32 %v1099, %v1117
      %v1122 = vadd.f32 %v1103, %v1117
      %v1123 = vadd.f32 %v1107, %v1117
      %v1124 = vadd.f32 %v1111, %v1117
      %v1125 = vadd.f32 %v1115, %v1117
      %1126 = vset.pattern.permute.xlu0 19
      %1127 = vperm.xlu0 %1126, %v1002
      %v1128 = vpop.permute.xlu0 %1127
      %1130 = vset.pattern.permute.xlu0 19
      %1131 = vperm.xlu0 %1130, %v1004
      %v1132 = vpop.permute.xlu0 %1131
      %1134 = vset.pattern.permute.xlu0 19
      %1135 = vperm.xlu0 %1134, %v1007
      %v1136 = vpop.permute.xlu0 %1135
      %1138 = vset.pattern.permute.xlu0 19
      %1139 = vperm.xlu0 %1138, %v1009
      %v1140 = vpop.permute.xlu0 %1139
      %1142 = vset.pattern.permute.xlu0 19
      %1143 = vperm.xlu0 %1142, %v1012
      %v1144 = vpop.permute.xlu0 %1143
      %1146 = vset.pattern.permute.xlu0 19
      %1147 = vperm.xlu0 %1146, %v1014
      %v1148 = vpop.permute.xlu0 %1147
      %1150 = vset.pattern.permute.xlu0 19
      %1151 = vperm.xlu0 %1150, %v1017
      %v1152 = vpop.permute.xlu0 %1151
      %1154 = vset.pattern.permute.xlu0 19
      %1155 = vperm.xlu0 %1154, %v1019
      %v1156 = vpop.permute.xlu0 %1155
      %v1158 = vperm.slane %v1069, 1
      %v1159 = vadd.f32 %v1128, %v1158
      %v1160 = vadd.f32 %v1132, %v1158
      %v1161 = vadd.f32 %v1136, %v1158
      %v1162 = vadd.f32 %v1140, %v1158
      %v1163 = vadd.f32 %v1144, %v1158
      %v1164 = vadd.f32 %v1148, %v1158
      %v1165 = vadd.f32 %v1152, %v1158
      %v1166 = vadd.f32 %v1156, %v1158
      %1175 = vrot.lane.b32.xlu0 %v1159, 64
      %v1176 = vpop.permute.xlu0 %1175
      %1177 = vrot.lane.b32.xlu0 %v1160, 64
      %v1178 = vpop.permute.xlu0 %1177
      %1179 = vrot.lane.b32.xlu0 %v1161, 64
      %v1180 = vpop.permute.xlu0 %1179
      %1181 = vrot.lane.b32.xlu0 %v1162, 64
      %v1182 = vpop.permute.xlu0 %1181
      %1183 = vrot.lane.b32.xlu0 %v1163, 64
      %v1184 = vpop.permute.xlu0 %1183
      %1185 = vrot.lane.b32.xlu0 %v1164, 64
      %v1186 = vpop.permute.xlu0 %1185
      %1187 = vrot.lane.b32.xlu0 %v1165, 64
      %v1188 = vpop.permute.xlu0 %1187
      %1189 = vrot.lane.b32.xlu0 %v1166, 64
      %v1190 = vpop.permute.xlu0 %1189
      %v1199 = vsel %vm520, %v1118, %v1176
      %v1200 = vsel %vm520, %v1119, %v1178
      %v1201 = vsel %vm520, %v1120, %v1180
      %v1202 = vsel %vm520, %v1121, %v1182
      %v1203 = vsel %vm520, %v1122, %v1184
      %v1204 = vsel %vm520, %v1123, %v1186
      %v1205 = vsel %vm520, %v1124, %v1188
      %v1206 = vsel %vm520, %v1125, %v1190
      %v1207 = vmul.f32 %v1199, 0.2
      %v1208 = vmul.f32 %v1200, 0.2
      %v1209 = vmul.f32 %v1201, 0.2
      %v1210 = vmul.f32 %v1202, 0.2
      %v1211 = vmul.f32 %v1203, 0.2
      %v1212 = vmul.f32 %v1204, 0.2
      %v1213 = vmul.f32 %v1205, 0.2
      %v1214 = vmul.f32 %v1206, 0.2
      %v1215 = vmax.f32 %v1199, %v1207
      %v1216 = vmax.f32 %v1200, %v1208
      %v1217 = vmax.f32 %v1201, %v1209
      %v1218 = vmax.f32 %v1202, %v1210
      %v1219 = vmax.f32 %v1203, %v1211
      %v1220 = vmax.f32 %v1204, %v1212
      %v1221 = vmax.f32 %v1205, %v1213
      %v1222 = vmax.f32 %v1206, %v1214
      %v1223 = vadd.f32 %v1215, %v577
      %v1224 = vadd.f32 %v1216, %v578
      %v1225 = vadd.f32 %v1217, %v579
      %v1226 = vadd.f32 %v1218, %v580
      %v1227 = vadd.f32 %v1219, %v581
      %v1228 = vadd.f32 %v1220, %v582
      %v1229 = vadd.f32 %v1221, %v583
      %v1230 = vadd.f32 %v1222, %v584
      %1231 = vmax.xlane.f32.xlu0 %v1223
      %v1232 = vpop.xlane.xlu0 %1231
      %1233 = vmax.xlane.f32.xlu0 %v1224
      %v1234 = vpop.xlane.xlu0 %1233
      %1235 = vmax.xlane.f32.xlu0 %v1225
      %v1236 = vpop.xlane.xlu0 %1235
      %1237 = vmax.xlane.f32.xlu0 %v1226
      %v1238 = vpop.xlane.xlu0 %1237
      %1239 = vmax.xlane.f32.xlu0 %v1227
      %v1240 = vpop.xlane.xlu0 %1239
      %1241 = vmax.xlane.f32.xlu0 %v1228
      %v1242 = vpop.xlane.xlu0 %1241
      %1243 = vmax.xlane.f32.xlu0 %v1229
      %v1244 = vpop.xlane.xlu0 %1243
      %1245 = vmax.xlane.f32.xlu0 %v1230
      %v1246 = vpop.xlane.xlu0 %1245
      %v1247 = vsub.f32 %v1223, %v1232
      %v1248 = vsub.f32 %v1224, %v1234
      %v1249 = vsub.f32 %v1225, %v1236
      %v1250 = vsub.f32 %v1226, %v1238
      %v1251 = vsub.f32 %v1227, %v1240
      %v1252 = vsub.f32 %v1228, %v1242
      %v1253 = vsub.f32 %v1229, %v1244
      %v1254 = vsub.f32 %v1230, %v1246
      %v1255 = vmul.f32 %v1247, 1.442695
      %v1256 = vpow.pop %v1255
      %v1257 = vmul.f32 %v1248, 1.442695
      %v1258 = vpow.pop %v1257
      %v1259 = vmul.f32 %v1249, 1.442695
      %v1260 = vpow.pop %v1259
      %v1261 = vmul.f32 %v1250, 1.442695
      %v1262 = vpow.pop %v1261
      %v1263 = vmul.f32 %v1251, 1.442695
      %v1264 = vpow.pop %v1263
      %v1265 = vmul.f32 %v1252, 1.442695
      %v1266 = vpow.pop %v1265
      %v1267 = vmul.f32 %v1253, 1.442695
      %v1268 = vpow.pop %v1267
      %v1269 = vmul.f32 %v1254, 1.442695
      %v1270 = vpow.pop %v1269
      %v1271 = vsel %vm520, %v1256, 0.0
      %1272 = vadd.xlane.f32.xlu0 %v1271
      %v1273 = vpop.xlane.xlu0 %1272
      %v1274 = vsel %vm520, %v1258, 0.0
      %1275 = vadd.xlane.f32.xlu0 %v1274
      %v1276 = vpop.xlane.xlu0 %1275
      %v1277 = vsel %vm520, %v1260, 0.0
      %1278 = vadd.xlane.f32.xlu0 %v1277
      %v1279 = vpop.xlane.xlu0 %1278
      %v1280 = vsel %vm520, %v1262, 0.0
      %1281 = vadd.xlane.f32.xlu0 %v1280
      %v1282 = vpop.xlane.xlu0 %1281
      %v1283 = vsel %vm520, %v1264, 0.0
      %1284 = vadd.xlane.f32.xlu0 %v1283
      %v1285 = vpop.xlane.xlu0 %1284
      %v1286 = vsel %vm520, %v1266, 0.0
      %1287 = vadd.xlane.f32.xlu0 %v1286
      %v1288 = vpop.xlane.xlu0 %1287
      %v1289 = vsel %vm520, %v1268, 0.0
      %1290 = vadd.xlane.f32.xlu0 %v1289
      %v1291 = vpop.xlane.xlu0 %1290
      %v1292 = vsel %vm520, %v1270, 0.0
      %1293 = vadd.xlane.f32.xlu0 %v1292
      %v1294 = vpop.xlane.xlu0 %1293
      %v1295 = vpack.c.bf16 %v1258, %v1256
      %v1296 = vpack.c.bf16 %v1262, %v1260
      %v1297 = vpack.c.bf16 %v1266, %v1264
      %v1298 = vpack.c.bf16 %v1270, %v1268
      %v1299 = vpack.c.bf16 %v1004, %v1002
      %v1300 = vpack.c.bf16 %v1009, %v1007
      %v1301 = vpack.c.bf16 %v1014, %v1012
      %v1302 = vpack.c.bf16 %v1019, %v1017
      %v1304 = vsel %vm520, %v1295, 0
      %v1307 = vsel %vm520, %v1296, 0
      %v1310 = vsel %vm520, %v1297, 0
      %v1313 = vsel %vm520, %v1298, 0
      %1315 = vmatpush.bf16.msra.mxu0 0
      %1316 = vmatpush.bf16.msra.mxu0 0
      %1317 = vmatpush.bf16.msra.mxu0 0
      %1318 = vmatpush.bf16.msra.mxu0 0
      %1319 = vmatpush.bf16.msra.mxu0 %v1302
      %1320 = vmatpush.bf16.msra.mxu0 %v1301
      %1321 = vmatpush.bf16.msra.mxu0 %v1300
      %1322 = vmatpush.bf16.msra.mxu0 %v1299
      %1323 = vmatmul.bf16.gmra.mxu0 %v1304
      %v1324 = vpop.f32.mrf.mxu0
      %v1325 = vadd.f32 0.0, %v1324
      %v1326 = vpop.f32.mrf.mxu0
      %v1327 = vadd.f32 0.0, %v1326
      %1328 = vmatmul.bf16.gmra.mxu0 %v1307
      %v1329 = vpop.f32.mrf.mxu0
      %v1330 = vadd.f32 0.0, %v1329
      %v1331 = vpop.f32.mrf.mxu0
      %v1332 = vadd.f32 0.0, %v1331
      %1333 = vmatmul.bf16.gmra.mxu0 %v1310
      %v1334 = vpop.f32.mrf.mxu0
      %v1335 = vadd.f32 0.0, %v1334
      %v1336 = vpop.f32.mrf.mxu0
      %v1337 = vadd.f32 0.0, %v1336
      %1338 = vmatmul.bf16.gmra.mxu0 %v1313
      %v1339 = vpop.f32.mrf.mxu0
      %v1340 = vadd.f32 0.0, %v1339
      %v1341 = vpop.f32.mrf.mxu0
      %v1342 = vadd.f32 0.0, %v1341
      %1343 = vdwg.mxu0
      %v1344 = vmax.f32 %v1273, 1e-20
      %v1345 = vmax.f32 %v1276, 1e-20
      %v1346 = vmax.f32 %v1279, 1e-20
      %v1347 = vmax.f32 %v1282, 1e-20
      %v1348 = vmax.f32 %v1285, 1e-20
      %v1349 = vmax.f32 %v1288, 1e-20
      %v1350 = vmax.f32 %v1291, 1e-20
      %v1351 = vmax.f32 %v1294, 1e-20
      %v1352 = vrcp.pop %v1344
      %v1353 = vrcp.pop %v1345
      %v1354 = vrcp.pop %v1346
      %v1355 = vrcp.pop %v1347
      %v1356 = vrcp.pop %v1348
      %v1357 = vrcp.pop %v1349
      %v1358 = vrcp.pop %v1350
      %v1359 = vrcp.pop %v1351
      %v1360 = vmul.f32 %v1325, %v1352
      %v1361 = vmul.f32 %v1327, %v1353
      %v1362 = vmul.f32 %v1330, %v1354
      %v1363 = vmul.f32 %v1332, %v1355
      %v1364 = vmul.f32 %v1335, %v1356
      %v1365 = vmul.f32 %v1337, %v1357
      %v1366 = vmul.f32 %v1340, %v1358
      %v1367 = vmul.f32 %v1342, %v1359
      %1376 = vrot.lane.b32.xlu0 %v1256, 64
      %v1377 = vpop.permute.xlu0 %1376
      %1378 = vrot.lane.b32.xlu0 %v1258, 64
      %v1379 = vpop.permute.xlu0 %1378
      %1380 = vrot.lane.b32.xlu0 %v1260, 64
      %v1381 = vpop.permute.xlu0 %1380
      %1382 = vrot.lane.b32.xlu0 %v1262, 64
      %v1383 = vpop.permute.xlu0 %1382
      %1384 = vrot.lane.b32.xlu0 %v1264, 64
      %v1385 = vpop.permute.xlu0 %1384
      %1386 = vrot.lane.b32.xlu0 %v1266, 64
      %v1387 = vpop.permute.xlu0 %1386
      %1388 = vrot.lane.b32.xlu0 %v1268, 64
      %v1389 = vpop.permute.xlu0 %1388
      %1390 = vrot.lane.b32.xlu0 %v1270, 64
      %v1391 = vpop.permute.xlu0 %1390
      %v1400 = vsel %vm520, %v1377, 0.0
      %1401 = vadd.xlane.f32.xlu0 %v1400
      %v1402 = vpop.xlane.xlu0 %1401
      %v1403 = vsel %vm520, %v1379, 0.0
      %1404 = vadd.xlane.f32.xlu0 %v1403
      %v1405 = vpop.xlane.xlu0 %1404
      %v1406 = vsel %vm520, %v1381, 0.0
      %1407 = vadd.xlane.f32.xlu0 %v1406
      %v1408 = vpop.xlane.xlu0 %1407
      %v1409 = vsel %vm520, %v1383, 0.0
      %1410 = vadd.xlane.f32.xlu0 %v1409
      %v1411 = vpop.xlane.xlu0 %1410
      %v1412 = vsel %vm520, %v1385, 0.0
      %1413 = vadd.xlane.f32.xlu0 %v1412
      %v1414 = vpop.xlane.xlu0 %1413
      %v1415 = vsel %vm520, %v1387, 0.0
      %1416 = vadd.xlane.f32.xlu0 %v1415
      %v1417 = vpop.xlane.xlu0 %1416
      %v1418 = vsel %vm520, %v1389, 0.0
      %1419 = vadd.xlane.f32.xlu0 %v1418
      %v1420 = vpop.xlane.xlu0 %1419
      %v1421 = vsel %vm520, %v1391, 0.0
      %1422 = vadd.xlane.f32.xlu0 %v1421
      %v1423 = vpop.xlane.xlu0 %1422
      %1428 = vrot.lane.b32.xlu0 %v1295, 64
      %v1429 = vpop.permute.xlu0 %1428
      %1430 = vrot.lane.b32.xlu0 %v1296, 64
      %v1431 = vpop.permute.xlu0 %1430
      %1432 = vrot.lane.b32.xlu0 %v1297, 64
      %v1433 = vpop.permute.xlu0 %1432
      %1434 = vrot.lane.b32.xlu0 %v1298, 64
      %v1435 = vpop.permute.xlu0 %1434
      %1440 = vrot.lane.b32.xlu0 %v1299, 120
      %v1441 = vpop.permute.xlu0 %1440
      %1442 = vrot.lane.b32.xlu0 %v1300, 120
      %v1443 = vpop.permute.xlu0 %1442
      %1444 = vrot.lane.b32.xlu0 %v1301, 120
      %v1445 = vpop.permute.xlu0 %1444
      %1446 = vrot.lane.b32.xlu0 %v1302, 120
      %v1447 = vpop.permute.xlu0 %1446
      %v1453 = vsel %vm520, %v1429, 0
      %v1456 = vsel %vm520, %v1431, 0
      %v1459 = vsel %vm520, %v1433, 0
      %v1462 = vsel %vm520, %v1435, 0
      %1464 = vmatpush.bf16.msra.mxu0 0
      %1465 = vmatpush.bf16.msra.mxu0 0
      %1466 = vmatpush.bf16.msra.mxu0 0
      %1467 = vmatpush.bf16.msra.mxu0 0
      %1468 = vmatpush.bf16.msra.mxu0 %v1447
      %1469 = vmatpush.bf16.msra.mxu0 %v1445
      %1470 = vmatpush.bf16.msra.mxu0 %v1443
      %1471 = vmatpush.bf16.msra.mxu0 %v1441
      %1472 = vmatmul.bf16.gmra.mxu0 %v1453
      %v1473 = vpop.f32.mrf.mxu0
      %v1474 = vadd.f32 0.0, %v1473
      %v1475 = vpop.f32.mrf.mxu0
      %v1476 = vadd.f32 0.0, %v1475
      %1477 = vmatmul.bf16.gmra.mxu0 %v1456
      %v1478 = vpop.f32.mrf.mxu0
      %v1479 = vadd.f32 0.0, %v1478
      %v1480 = vpop.f32.mrf.mxu0
      %v1481 = vadd.f32 0.0, %v1480
      %1482 = vmatmul.bf16.gmra.mxu0 %v1459
      %v1483 = vpop.f32.mrf.mxu0
      %v1484 = vadd.f32 0.0, %v1483
      %v1485 = vpop.f32.mrf.mxu0
      %v1486 = vadd.f32 0.0, %v1485
      %1487 = vmatmul.bf16.gmra.mxu0 %v1462
      %v1488 = vpop.f32.mrf.mxu0
      %v1489 = vadd.f32 0.0, %v1488
      %v1490 = vpop.f32.mrf.mxu0
      %v1491 = vadd.f32 0.0, %v1490
      %1492 = vdwg.mxu0
      %v1493 = vmax.f32 %v1402, 1e-20
      %v1494 = vmax.f32 %v1405, 1e-20
      %v1495 = vmax.f32 %v1408, 1e-20
      %v1496 = vmax.f32 %v1411, 1e-20
      %v1497 = vmax.f32 %v1414, 1e-20
      %v1498 = vmax.f32 %v1417, 1e-20
      %v1499 = vmax.f32 %v1420, 1e-20
      %v1500 = vmax.f32 %v1423, 1e-20
      %v1501 = vrcp.pop %v1493
      %v1502 = vrcp.pop %v1494
      %v1503 = vrcp.pop %v1495
      %v1504 = vrcp.pop %v1496
      %v1505 = vrcp.pop %v1497
      %v1506 = vrcp.pop %v1498
      %v1507 = vrcp.pop %v1499
      %v1508 = vrcp.pop %v1500
      %v1509 = vmul.f32 %v1474, %v1501
      %v1510 = vmul.f32 %v1476, %v1502
      %v1511 = vmul.f32 %v1479, %v1503
      %v1512 = vmul.f32 %v1481, %v1504
      %v1513 = vmul.f32 %v1484, %v1505
      %v1514 = vmul.f32 %v1486, %v1506
      %v1515 = vmul.f32 %v1489, %v1507
      %v1516 = vmul.f32 %v1491, %v1508
      %1525 = vrot.lane.b32.xlu0 %v1509, 8
      %v1526 = vpop.permute.xlu0 %1525
      %1527 = vrot.lane.b32.xlu0 %v1510, 8
      %v1528 = vpop.permute.xlu0 %1527
      %1529 = vrot.lane.b32.xlu0 %v1511, 8
      %v1530 = vpop.permute.xlu0 %1529
      %1531 = vrot.lane.b32.xlu0 %v1512, 8
      %v1532 = vpop.permute.xlu0 %1531
      %1533 = vrot.lane.b32.xlu0 %v1513, 8
      %v1534 = vpop.permute.xlu0 %1533
      %1535 = vrot.lane.b32.xlu0 %v1514, 8
      %v1536 = vpop.permute.xlu0 %1535
      %1537 = vrot.lane.b32.xlu0 %v1515, 8
      %v1538 = vpop.permute.xlu0 %1537
      %1539 = vrot.lane.b32.xlu0 %v1516, 8
      %v1540 = vpop.permute.xlu0 %1539
      %v1549 = vsel %vm911, %v1360, %v1526
      %v1550 = vsel %vm911, %v1361, %v1528
      %v1551 = vsel %vm911, %v1362, %v1530
      %v1552 = vsel %vm911, %v1363, %v1532
      %v1553 = vsel %vm911, %v1364, %v1534
      %v1554 = vsel %vm911, %v1365, %v1536
      %v1555 = vsel %vm911, %v1366, %v1538
      %v1556 = vsel %vm911, %v1367, %v1540
      %vm1557 = vcmp.gt.f32.partialorder %v1549, 0.0
      %vm1558 = vcmp.gt.f32.partialorder %v1550, 0.0
      %vm1559 = vcmp.gt.f32.partialorder %v1551, 0.0
      %vm1560 = vcmp.gt.f32.partialorder %v1552, 0.0
      %vm1561 = vcmp.gt.f32.partialorder %v1553, 0.0
      %vm1562 = vcmp.gt.f32.partialorder %v1554, 0.0
      %vm1563 = vcmp.gt.f32.partialorder %v1555, 0.0
      %vm1564 = vcmp.gt.f32.partialorder %v1556, 0.0
      %v1565 = vmin.f32 %v1549, 0.0
      %v1566 = vmin.f32 %v1550, 0.0
      %v1567 = vmin.f32 %v1551, 0.0
      %v1568 = vmin.f32 %v1552, 0.0
      %v1569 = vmin.f32 %v1553, 0.0
      %v1570 = vmin.f32 %v1554, 0.0
      %v1571 = vmin.f32 %v1555, 0.0
      %v1572 = vmin.f32 %v1556, 0.0
      %v1573 = vmul.f32 %v1565, 1.442695
      %v1574 = vpow.pop %v1573
      %v1575 = vmul.f32 %v1566, 1.442695
      %v1576 = vpow.pop %v1575
      %v1577 = vmul.f32 %v1567, 1.442695
      %v1578 = vpow.pop %v1577
      %v1579 = vmul.f32 %v1568, 1.442695
      %v1580 = vpow.pop %v1579
      %v1581 = vmul.f32 %v1569, 1.442695
      %v1582 = vpow.pop %v1581
      %v1583 = vmul.f32 %v1570, 1.442695
      %v1584 = vpow.pop %v1583
      %v1585 = vmul.f32 %v1571, 1.442695
      %v1586 = vpow.pop %v1585
      %v1587 = vmul.f32 %v1572, 1.442695
      %v1588 = vpow.pop %v1587
      %v1589 = vsub.f32 %v1574, 1.0
      %v1590 = vsub.f32 %v1576, 1.0
      %v1591 = vsub.f32 %v1578, 1.0
      %v1592 = vsub.f32 %v1580, 1.0
      %v1593 = vsub.f32 %v1582, 1.0
      %v1594 = vsub.f32 %v1584, 1.0
      %v1595 = vsub.f32 %v1586, 1.0
      %v1596 = vsub.f32 %v1588, 1.0
      %v1597 = vsel %vm1557, %v1549, %v1589
      %v1598 = vsel %vm1558, %v1550, %v1590
      %v1599 = vsel %vm1559, %v1551, %v1591
      %v1600 = vsel %vm1560, %v1552, %v1592
      %v1601 = vsel %vm1561, %v1553, %v1593
      %v1602 = vsel %vm1562, %v1554, %v1594
      %v1603 = vsel %vm1563, %v1555, %v1595
      %v1604 = vsel %vm1564, %v1556, %v1596
      %v1605 = vpack.c.bf16 %v1598, %v1597
      %v1606 = vpack.c.bf16 %v1600, %v1599
      %v1607 = vpack.c.bf16 %v1602, %v1601
      %v1608 = vpack.c.bf16 %v1604, %v1603
      %v1609 = vld [vmem:[%s4] sm:$0xf]
      %v1610 = vld [vmem:[%s4 + $0x4] sm:$0xf]
      %v1613 = vunpack.c.l.b16 %v1609
      %v1614 = vunpack.c.l.b16 %v1610
      %v1615 = vpack.c.b16 %v1614, %v1613
      %v1618 = vsel %vm300, %v1605, 0
      %v1621 = vsel %vm300, %v1606, 0
      %v1624 = vsel %vm300, %v1607, 0
      %v1627 = vsel %vm300, %v1608, 0
      %1629 = vmatpush.bf16.msra.mxu0 0
      %1630 = vmatpush.bf16.msra.mxu0 0
      %1631 = vmatpush.bf16.msra.mxu0 0
      %1632 = vmatpush.bf16.msra.mxu0 0
      %1633 = vmatpush.bf16.msra.mxu0 0
      %1634 = vmatpush.bf16.msra.mxu0 0
      %1635 = vmatpush.bf16.msra.mxu0 0
      %1636 = vmatpush.bf16.msra.mxu0 %v1615
      %1637 = vmatmul.bf16.gmra.mxu0 %v1618
      %v1638 = vpop.f32.mrf.mxu0
      %v1639 = vadd.f32 0.0, %v1638
      %v1640 = vpop.f32.mrf.mxu0
      %v1641 = vadd.f32 0.0, %v1640
      %1642 = vmatmul.bf16.gmra.mxu0 %v1621
      %v1643 = vpop.f32.mrf.mxu0
      %v1644 = vadd.f32 0.0, %v1643
      %v1645 = vpop.f32.mrf.mxu0
      %v1646 = vadd.f32 0.0, %v1645
      %1647 = vmatmul.bf16.gmra.mxu0 %v1624
      %v1648 = vpop.f32.mrf.mxu0
      %v1649 = vadd.f32 0.0, %v1648
      %v1650 = vpop.f32.mrf.mxu0
      %v1651 = vadd.f32 0.0, %v1650
      %1652 = vmatmul.bf16.gmra.mxu0 %v1627
      %v1653 = vpop.f32.mrf.mxu0
      %v1654 = vadd.f32 0.0, %v1653
      %v1655 = vpop.f32.mrf.mxu0
      %v1656 = vadd.f32 0.0, %v1655
      %1657 = vdwg.mxu0
      %1666 = vrot.lane.b32.xlu0 %v1639, 124
      %v1667 = vpop.permute.xlu0 %1666
      %1668 = vrot.lane.b32.xlu0 %v1641, 124
      %v1669 = vpop.permute.xlu0 %1668
      %1670 = vrot.lane.b32.xlu0 %v1644, 124
      %v1671 = vpop.permute.xlu0 %1670
      %1672 = vrot.lane.b32.xlu0 %v1646, 124
      %v1673 = vpop.permute.xlu0 %1672
      %1674 = vrot.lane.b32.xlu0 %v1649, 124
      %v1675 = vpop.permute.xlu0 %1674
      %1676 = vrot.lane.b32.xlu0 %v1651, 124
      %v1677 = vpop.permute.xlu0 %1676
      %1678 = vrot.lane.b32.xlu0 %v1654, 124
      %v1679 = vpop.permute.xlu0 %1678
      %1680 = vrot.lane.b32.xlu0 %v1656, 124
      %v1681 = vpop.permute.xlu0 %1680
      %1690 = vxpose.xlu0.b32.start [1/16] %v1667, 128
      %1691 = vxpose.xlu0.b32.cont [2/16] %v1669, 128
      %1692 = vxpose.xlu0.b32.cont [3/16] %v1671, 128
      %1693 = vxpose.xlu0.b32.cont [4/16] %v1673, 128
      %1694 = vxpose.xlu0.b32.cont [5/16] %v1675, 128
      %1695 = vxpose.xlu0.b32.cont [6/16] %v1677, 128
      %1696 = vxpose.xlu0.b32.cont [7/16] %v1679, 128
      %1697 = vxpose.xlu0.b32.cont [8/16] %v1681, 128
      %1698 = vxpose.xlu0.b32.cont [9/16] 0.0, 128
      %1699 = vxpose.xlu0.b32.cont [10/16] 0.0, 128
      %1700 = vxpose.xlu0.b32.cont [11/16] 0.0, 128
      %1701 = vxpose.xlu0.b32.cont [12/16] 0.0, 128
      %1702 = vxpose.xlu0.b32.cont [13/16] 0.0, 128
      %1703 = vxpose.xlu0.b32.cont [14/16] 0.0, 128
      %1704 = vxpose.xlu0.b32.cont [15/16] 0.0, 128
      %1705 = vxpose.xlu0.b32.end [16/16] 0.0, 128
      %v1706 = vpop.trf.xlu0
      %v1707 = vpop.trf.xlu0
      %v1708 = vpop.trf.xlu0
      %v1709 = vpop.trf.xlu0
      %v1710 = vpop.trf.xlu0
      %v1711 = vpop.trf.xlu0
      %v1712 = vpop.trf.xlu0
      %v1713 = vpop.trf.xlu0
      %v1714 = vpop.trf.xlu0
      %v1715 = vpop.trf.xlu0
      %v1716 = vpop.trf.xlu0
      %v1717 = vpop.trf.xlu0
      %v1718 = vpop.trf.xlu0
      %v1719 = vpop.trf.xlu0
      %v1720 = vpop.trf.xlu0
      %v1721 = vpop.trf.xlu0
      %1722 = vset.pattern.permute.xlu0 5
      %1723 = vperm.xlu0 %1722, %v1639
      %v1724 = vpop.permute.xlu0 %1723
      %1726 = vset.pattern.permute.xlu0 5
      %1727 = vperm.xlu0 %1726, %v1641
      %v1728 = vpop.permute.xlu0 %1727
      %1730 = vset.pattern.permute.xlu0 5
      %1731 = vperm.xlu0 %1730, %v1644
      %v1732 = vpop.permute.xlu0 %1731
      %1734 = vset.pattern.permute.xlu0 5
      %1735 = vperm.xlu0 %1734, %v1646
      %v1736 = vpop.permute.xlu0 %1735
      %1738 = vset.pattern.permute.xlu0 5
      %1739 = vperm.xlu0 %1738, %v1649
      %v1740 = vpop.permute.xlu0 %1739
      %1742 = vset.pattern.permute.xlu0 5
      %1743 = vperm.xlu0 %1742, %v1651
      %v1744 = vpop.permute.xlu0 %1743
      %1746 = vset.pattern.permute.xlu0 5
      %1747 = vperm.xlu0 %1746, %v1654
      %v1748 = vpop.permute.xlu0 %1747
      %1750 = vset.pattern.permute.xlu0 5
      %1751 = vperm.xlu0 %1750, %v1656
      %v1752 = vpop.permute.xlu0 %1751
      %v1754 = vperm.slane %v1706, 0
      %v1755 = vadd.f32 %v1724, %v1754
      %v1756 = vadd.f32 %v1728, %v1754
      %v1757 = vadd.f32 %v1732, %v1754
      %v1758 = vadd.f32 %v1736, %v1754
      %v1759 = vadd.f32 %v1740, %v1754
      %v1760 = vadd.f32 %v1744, %v1754
      %v1761 = vadd.f32 %v1748, %v1754
      %v1762 = vadd.f32 %v1752, %v1754
      %v1763 = vmul.f32 %v1755, 0.2
      %v1764 = vmul.f32 %v1756, 0.2
      %v1765 = vmul.f32 %v1757, 0.2
      %v1766 = vmul.f32 %v1758, 0.2
      %v1767 = vmul.f32 %v1759, 0.2
      %v1768 = vmul.f32 %v1760, 0.2
      %v1769 = vmul.f32 %v1761, 0.2
      %v1770 = vmul.f32 %v1762, 0.2
      %v1771 = vmax.f32 %v1755, %v1763
      %v1772 = vmax.f32 %v1756, %v1764
      %v1773 = vmax.f32 %v1757, %v1765
      %v1774 = vmax.f32 %v1758, %v1766
      %v1775 = vmax.f32 %v1759, %v1767
      %v1776 = vmax.f32 %v1760, %v1768
      %v1777 = vmax.f32 %v1761, %v1769
      %v1778 = vmax.f32 %v1762, %v1770
      %v1779 = vadd.f32 %v1771, %v272
      %v1780 = vadd.f32 %v1772, %v273
      %v1781 = vadd.f32 %v1773, %v274
      %v1782 = vadd.f32 %v1774, %v275
      %v1783 = vadd.f32 %v1775, %v276
      %v1784 = vadd.f32 %v1776, %v277
      %v1785 = vadd.f32 %v1777, %v278
      %v1786 = vadd.f32 %v1778, %v279
      %v1787 = vsel %vm520, %v1779, -inf
      %1788 = vmax.xlane.f32.xlu0 %v1787
      %v1789 = vpop.xlane.xlu0 %1788
      %v1790 = vsel %vm520, %v1780, -inf
      %1791 = vmax.xlane.f32.xlu0 %v1790
      %v1792 = vpop.xlane.xlu0 %1791
      %v1793 = vsel %vm520, %v1781, -inf
      %1794 = vmax.xlane.f32.xlu0 %v1793
      %v1795 = vpop.xlane.xlu0 %1794
      %v1796 = vsel %vm520, %v1782, -inf
      %1797 = vmax.xlane.f32.xlu0 %v1796
      %v1798 = vpop.xlane.xlu0 %1797
      %v1799 = vsel %vm520, %v1783, -inf
      %1800 = vmax.xlane.f32.xlu0 %v1799
      %v1801 = vpop.xlane.xlu0 %1800
      %v1802 = vsel %vm520, %v1784, -inf
      %1803 = vmax.xlane.f32.xlu0 %v1802
      %v1804 = vpop.xlane.xlu0 %1803
      %v1805 = vsel %vm520, %v1785, -inf
      %1806 = vmax.xlane.f32.xlu0 %v1805
      %v1807 = vpop.xlane.xlu0 %1806
      %v1808 = vsel %vm520, %v1786, -inf
      %1809 = vmax.xlane.f32.xlu0 %v1808
      %v1810 = vpop.xlane.xlu0 %1809
      %v1811 = vsub.f32 %v1779, %v1789
      %v1812 = vsub.f32 %v1780, %v1792
      %v1813 = vsub.f32 %v1781, %v1795
      %v1814 = vsub.f32 %v1782, %v1798
      %v1815 = vsub.f32 %v1783, %v1801
      %v1816 = vsub.f32 %v1784, %v1804
      %v1817 = vsub.f32 %v1785, %v1807
      %v1818 = vsub.f32 %v1786, %v1810
      %v1819 = vmul.f32 %v1811, 1.442695
      %v1820 = vpow.pop %v1819
      %v1821 = vmul.f32 %v1812, 1.442695
      %v1822 = vpow.pop %v1821
      %v1823 = vmul.f32 %v1813, 1.442695
      %v1824 = vpow.pop %v1823
      %v1825 = vmul.f32 %v1814, 1.442695
      %v1826 = vpow.pop %v1825
      %v1827 = vmul.f32 %v1815, 1.442695
      %v1828 = vpow.pop %v1827
      %v1829 = vmul.f32 %v1816, 1.442695
      %v1830 = vpow.pop %v1829
      %v1831 = vmul.f32 %v1817, 1.442695
      %v1832 = vpow.pop %v1831
      %v1833 = vmul.f32 %v1818, 1.442695
      %v1834 = vpow.pop %v1833
      %v1835 = vsel %vm520, %v1820, 0.0
      %1836 = vadd.xlane.f32.xlu0 %v1835
      %v1837 = vpop.xlane.xlu0 %1836
      %v1838 = vsel %vm520, %v1822, 0.0
      %1839 = vadd.xlane.f32.xlu0 %v1838
      %v1840 = vpop.xlane.xlu0 %1839
      %v1841 = vsel %vm520, %v1824, 0.0
      %1842 = vadd.xlane.f32.xlu0 %v1841
      %v1843 = vpop.xlane.xlu0 %1842
      %v1844 = vsel %vm520, %v1826, 0.0
      %1845 = vadd.xlane.f32.xlu0 %v1844
      %v1846 = vpop.xlane.xlu0 %1845
      %v1847 = vsel %vm520, %v1828, 0.0
      %1848 = vadd.xlane.f32.xlu0 %v1847
      %v1849 = vpop.xlane.xlu0 %1848
      %v1850 = vsel %vm520, %v1830, 0.0
      %1851 = vadd.xlane.f32.xlu0 %v1850
      %v1852 = vpop.xlane.xlu0 %1851
      %v1853 = vsel %vm520, %v1832, 0.0
      %1854 = vadd.xlane.f32.xlu0 %v1853
      %v1855 = vpop.xlane.xlu0 %1854
      %v1856 = vsel %vm520, %v1834, 0.0
      %1857 = vadd.xlane.f32.xlu0 %v1856
      %v1858 = vpop.xlane.xlu0 %1857
      %v1859 = vpack.c.bf16 %v1822, %v1820
      %v1860 = vpack.c.bf16 %v1826, %v1824
      %v1861 = vpack.c.bf16 %v1830, %v1828
      %v1862 = vpack.c.bf16 %v1834, %v1832
      %v1863 = vpack.c.bf16 %v1641, %v1639
      %v1864 = vpack.c.bf16 %v1646, %v1644
      %v1865 = vpack.c.bf16 %v1651, %v1649
      %v1866 = vpack.c.bf16 %v1656, %v1654
      %v1868 = vsel %vm520, %v1859, 0
      %v1871 = vsel %vm520, %v1860, 0
      %v1874 = vsel %vm520, %v1861, 0
      %v1877 = vsel %vm520, %v1862, 0
      %1879 = vmatpush.bf16.msra.mxu0 0
      %1880 = vmatpush.bf16.msra.mxu0 0
      %1881 = vmatpush.bf16.msra.mxu0 0
      %1882 = vmatpush.bf16.msra.mxu0 0
      %1883 = vmatpush.bf16.msra.mxu0 %v1866
      %1884 = vmatpush.bf16.msra.mxu0 %v1865
      %1885 = vmatpush.bf16.msra.mxu0 %v1864
      %1886 = vmatpush.bf16.msra.mxu0 %v1863
      %1887 = vmatmul.bf16.gmra.mxu0 %v1868
      %v1888 = vpop.f32.mrf.mxu0
      %v1889 = vadd.f32 0.0, %v1888
      %v1890 = vpop.f32.mrf.mxu0
      %v1891 = vadd.f32 0.0, %v1890
      %1892 = vmatmul.bf16.gmra.mxu0 %v1871
      %v1893 = vpop.f32.mrf.mxu0
      %v1894 = vadd.f32 0.0, %v1893
      %v1895 = vpop.f32.mrf.mxu0
      %v1896 = vadd.f32 0.0, %v1895
      %1897 = vmatmul.bf16.gmra.mxu0 %v1874
      %v1898 = vpop.f32.mrf.mxu0
      %v1899 = vadd.f32 0.0, %v1898
      %v1900 = vpop.f32.mrf.mxu0
      %v1901 = vadd.f32 0.0, %v1900
      %1902 = vmatmul.bf16.gmra.mxu0 %v1877
      %v1903 = vpop.f32.mrf.mxu0
      %v1904 = vadd.f32 0.0, %v1903
      %v1905 = vpop.f32.mrf.mxu0
      %v1906 = vadd.f32 0.0, %v1905
      %1907 = vdwg.mxu0
      %v1908 = vmax.f32 %v1837, 1e-20
      %v1909 = vmax.f32 %v1840, 1e-20
      %v1910 = vmax.f32 %v1843, 1e-20
      %v1911 = vmax.f32 %v1846, 1e-20
      %v1912 = vmax.f32 %v1849, 1e-20
      %v1913 = vmax.f32 %v1852, 1e-20
      %v1914 = vmax.f32 %v1855, 1e-20
      %v1915 = vmax.f32 %v1858, 1e-20
      %v1916 = vrcp.pop %v1908
      %v1917 = vrcp.pop %v1909
      %v1918 = vrcp.pop %v1910
      %v1919 = vrcp.pop %v1911
      %v1920 = vrcp.pop %v1912
      %v1921 = vrcp.pop %v1913
      %v1922 = vrcp.pop %v1914
      %v1923 = vrcp.pop %v1915
      %v1924 = vmul.f32 %v1889, %v1916
      %v1925 = vmul.f32 %v1891, %v1917
      %v1926 = vmul.f32 %v1894, %v1918
      %v1927 = vmul.f32 %v1896, %v1919
      %v1928 = vmul.f32 %v1899, %v1920
      %v1929 = vmul.f32 %v1901, %v1921
      %v1930 = vmul.f32 %v1904, %v1922
      %v1931 = vmul.f32 %v1906, %v1923
      %vm1932 = vcmask 31744
      %1933 = vst.msk [vmem:[%s244] sm:$0xff] %vm1932, %v1924
      %1934 = vst.msk [vmem:[%s244 + $0x8] sm:$0xff] %vm1932, %v1925
      %1935 = vst.msk [vmem:[%s244 + $0x10] sm:$0xff] %vm1932, %v1926
      %1936 = vst.msk [vmem:[%s244 + $0x18] sm:$0xff] %vm1932, %v1927
      %1937 = vst.msk [vmem:[%s244 + $0x20] sm:$0xff] %vm1932, %v1928
      %1938 = vst.msk [vmem:[%s244 + $0x28] sm:$0xff] %vm1932, %v1929
      %1939 = vst.msk [vmem:[%s244 + $0x30] sm:$0xff] %vm1932, %v1930
      %1940 = vst.msk [vmem:[%s244 + $0x38] sm:$0xff] %vm1932, %v1931
      %p1941 = scmp.lt.s32.totalorder %s16, 1
      %s1942 = scalar_select %p1941, %s16, 1
      %s1943 = smul.addr %s1942, 8
      %s1944 = smul.addr %s1943, 8
      %s1945 = scalar_lea.vmem %s5, %s1944
      // Predicated region
      $region41: #{gat_forward.1} parent=39 // pred_check
        %p1946 = pneg %p149
      $region42: #{gat_forward.1} parent=39 // pred_check_branch
        %1948 = sbr.rel (%p1946) target = $region44
      $region43: #{gat_forward.1} parent=39 // pred_region
        _
      $region44: #{gat_forward.1} parent=39 // pred_fallthru
        _
    $region40: #{gat_forward.1} parent=5 // pred_fallthru
      _
    %p1949 = scmp.le.s32.totalorder 2, %s11
    // Predicated region
    $region45: #{gat_forward.1} parent=5 // pred_check
      %p1950 = pneg %p1949
    $region46: #{gat_forward.1} parent=5 // pred_check_branch
      %1952 = sbr.rel (%p1950) target = $region48
    $region47: #{gat_forward.1} parent=5 // pred_region
      %s1953 = ssub.s32 %s11, 2
      // Predicated region
      $region49: #{gat_forward.1} parent=47 // pred_check
        %p1954 = pneg %p155
      $region50: #{gat_forward.1} parent=47 // pred_check_branch
        %1956 = sbr.rel (%p1954) target = $region52
      $region51: #{gat_forward.1} parent=47 // pred_region
        %p1957 = scmp.lt.s32.totalorder %s17, 1
        %s1958 = scalar_select %p1957, %s17, 1
        %s1959 = smul.addr %s1958, 8
        %s1960 = smul.addr %s1959, 8
        %s1961 = scalar_lea.vmem %s5, %s1960
      $region52: #{gat_forward.1} parent=47 // pred_fallthru
        _
    $region48: #{gat_forward.1} parent=5 // pred_fallthru
      _
  $region6: #{gat_forward.1} parent=0 // loop_footer
    %s15 = sadd.s32 1, %s11
  $region7: #{gat_forward.1} parent=0 // loop_footer_branch
    %10 = sbr.rel target = $region3
  $region8: #{gat_forward.1} parent=0 // loop_exit
    _

</llo_original>
